<compile_context>
chip_gen: v6e
topology: v6e:2x2x1
jax: 0.10.0
libtpu: 0.0.40
codegen_flags: <defaults>
</compile_context>

<pallas_src>
import numpy as np
import jax
import jax.numpy as jnp
from jax import lax
from jax.experimental import pallas as pl
from jax.experimental.pallas import tpu as pltpu

B, H, W = 2, 40, 250
HP, WPAD = H + 2, W + 2              # padded input: 42 x 252
HO = (H + 2 - 3) // 3 + 1            # 14 conv output rows
WO = (W + 2 - 3) // 5 + 1            # 50 conv output cols
WP = WO // 2                         # 25 cols after MaxPool(1,2)
NFEAT = HO * WP                      # 350 = Linear in_features
BH = B * HO                          # 28 rows in the conv slab
assert NFEAT == 350, "Linear(350) geometry mismatch"

BN_EPS = 1e-5
N_CONV = float(B * HO * WO)          # 1400 elements for BatchNorm batch stats


def _build_selection_constants():
    """Exact 0/1 matrices (compile-time constants, no runtime host compute)."""
    # Row gather: (Rbig @ X2)[dh*BH + b*HO + i, :] = xp[b, 3i+dh, :]
    r_big = np.zeros((3 * BH, B * HP), np.float32)
    for dh in range(3):
        for b in range(B):
            for i in range(HO):
                r_big[dh * BH + b * HO + i, b * HP + 3 * i + dh] = 1.0
    # Column gather: (. @ S)[:, dw*WO + p*WP + k] = input column 10k + 5p + dw
    s_sel = np.zeros((WPAD, 3 * WO), np.float32)
    for dw in range(3):
        for p in range(2):
            for k in range(WP):
                s_sel[10 * k + 5 * p + dw, dw * WO + p * WP + k] = 1.0
    # Flatten helpers: tiled = pooled @ T ; flat = Bsel @ (tiled * D)
    t_tile = np.zeros((WP, NFEAT), np.float32)
    for f in range(NFEAT):
        t_tile[f % WP, f] = 1.0
    d_mask = np.zeros((BH, NFEAT), np.float32)
    for r in range(BH):
        for f in range(NFEAT):
            if (r % HO) == (f // WP):
                d_mask[r, f] = 1.0
    b_sel = np.zeros((B, BH), np.float32)
    for b in range(B):
        b_sel[b, b * HO:(b + 1) * HO] = 1.0
    return r_big, s_sel, t_tile, d_mask, b_sel


R_BIG, S_SEL, T_TILE, D_MASK, B_SEL = _build_selection_constants()


def cnn3_kernel(x2_ref, r_ref, s_ref, t_ref, d_ref, bsel_ref,
                convw_ref, convb_ref, gamma_ref, beta_ref,
                lwt_ref, linb_ref, out_ref):
    # ---- In-kernel tap extraction: two exact 0/1 selection matmuls (MXU) ----
    rows = jnp.dot(r_ref[...], x2_ref[...],
                   preferred_element_type=jnp.float32)          # (84, 252)
    taps = jnp.dot(rows, s_ref[...],
                   preferred_element_type=jnp.float32)          # (84, 150)
    # taps[dh*BH + b*HO + i, dw*WO + p*WP + k] = xp[b, 3i+dh, 10k+5p+dw]

    # ---- Conv2d(1,1,(3,3),stride=(3,5),pad=1): 9-tap MAC, weights in SMEM ----
    acc = convw_ref[0] * taps[0:BH, 0:WO]
    for t in range(1, 9):
        dh, dw = divmod(t, 3)
        acc = acc + convw_ref[t] * taps[dh * BH:(dh + 1) * BH,
                                        dw * WO:(dw + 1) * WO]
    acc = acc + convb_ref[0]                                    # (28, 50)

    # ---- BatchNorm2d(1), training-mode batch stats (biased variance) --------
    mu = jnp.sum(acc) / N_CONV
    d = acc - mu                                                # reused below
    var = jnp.sum(d * d) / N_CONV
    scale = gamma_ref[0] * lax.rsqrt(var + BN_EPS)              # folded scalar
    z = scale * d + beta_ref[0]

    # ---- ELU(alpha=1) --------------------------------------------------------
    z = jnp.where(z > 0.0, z, jnp.exp(z) - 1.0)

    # ---- MaxPool2d((1,2)): max over the two parity halves of the lane axis --
    pooled = jnp.maximum(z[:, 0:WP], z[:, WP:2 * WP])           # (28, 25)

    # ---- Flatten to lane-dense (B, 350) via exact selection matmuls ---------
    tiled = jnp.dot(pooled, t_ref[...],
                    preferred_element_type=jnp.float32)         # (28, 350)
    flat = jnp.dot(bsel_ref[...], tiled * d_ref[...],
                   preferred_element_type=jnp.float32)          # (B, 350)

    # ---- Linear(350 -> 2): single MXU dot, bias from SMEM scalars -----------
    logits = jnp.dot(flat, lwt_ref[...],
                     preferred_element_type=jnp.float32)        # (B, 2)
    l0 = logits[:, 0:1] + linb_ref[0]
    l1 = logits[:, 1:2] + linb_ref[1]

    # ---- Softmax(dim=1) over the two classes ---------------------------------
    m = jnp.maximum(l0, l1)
    e0 = jnp.exp(l0 - m)
    e1 = jnp.exp(l1 - m)
    inv = 1.0 / (e0 + e1)
    out_ref[:, 0:1] = e0 * inv
    out_ref[:, 1:2] = e1 * inv


@jax.jit
def cnn3_forward(x_nchw, params):
    conv_w, conv_b, gamma, beta, lin_w, lin_b = params
    x = x_nchw[:, 0, :, :].astype(jnp.float32)
    xp = jnp.pad(x, ((0, 0), (1, 1), (1, 1)))                   # (B, 42, 252)
    x2 = xp.reshape(B * HP, WPAD)                               # (84, 252)

    vmem = pl.BlockSpec(memory_space=pltpu.MemorySpace.VMEM)
    smem = pl.BlockSpec(memory_space=pltpu.MemorySpace.SMEM)

    return pl.pallas_call(
        cnn3_kernel,
        out_shape=jax.ShapeDtypeStruct((B, 2), jnp.float32),
        in_specs=[vmem,   # x2        (84, 252)
                  vmem,   # R_BIG     (84, 84)
                  vmem,   # S_SEL     (252, 150)
                  vmem,   # T_TILE    (25, 350)
                  vmem,   # D_MASK    (28, 350)
                  vmem,   # B_SEL     (2, 28)
                  smem,   # conv_w    (9,)
                  smem,   # conv_b    (1,)
                  smem,   # bn gamma  (1,)
                  smem,   # bn beta   (1,)
                  vmem,   # lin_w.T   (350, 2)
                  smem],  # lin_b     (2,)
        out_specs=vmem,
    )(x2, R_BIG, S_SEL, T_TILE, D_MASK, B_SEL,
      conv_w.reshape(9), conv_b, gamma, beta,
      lin_w.T, lin_b)


def cnn3_reference(x_nchw, params):
    """Pure-JAX reference of the PyTorch forward (train-mode BatchNorm)."""
    conv_w, conv_b, gamma, beta, lin_w, lin_b = params
    c = lax.conv_general_dilated(
        x_nchw, conv_w, window_strides=(3, 5), padding=((1, 1), (1, 1)),
        dimension_numbers=("NCHW", "OIHW", "NCHW"))
    c = c + conv_b.reshape(1, 1, 1, 1)
    mu = jnp.mean(c)
    var = jnp.mean((c - mu) ** 2)
    y = gamma.reshape(1, 1, 1, 1) * (c - mu) / jnp.sqrt(var + BN_EPS) \
        + beta.reshape(1, 1, 1, 1)
    y = jnp.where(y > 0.0, y, jnp.exp(y) - 1.0)
    y = y.reshape(B, 1, HO, WP, 2).max(axis=-1)
    feat = y.reshape(B, HO * WP)
    logits = feat @ lin_w.T + lin_b
    return jax.nn.softmax(logits, axis=1)


if __name__ == "__main__":
    key = jax.random.PRNGKey(0)
    ks = jax.random.split(key, 5)
    conv_w = jax.random.normal(ks[0], (1, 1, 3, 3), jnp.float32) * 0.3
    conv_b = jax.random.normal(ks[1], (1,), jnp.float32) * 0.1
    gamma = jnp.ones((1,), jnp.float32)       # BatchNorm2d default weight
    beta = jnp.zeros((1,), jnp.float32)       # BatchNorm2d default bias
    lin_w = jax.random.normal(ks[2], (2, 350), jnp.float32) * 0.05
    lin_b = jax.random.normal(ks[3], (2,), jnp.float32) * 0.05
    params = (conv_w, conv_b, gamma, beta, lin_w, lin_b)

    x = jax.random.normal(ks[4], (B, 1, H, W), jnp.float32)

    out = jax.block_until_ready(cnn3_forward(x, params))
    ref = jax.block_until_ready(cnn3_reference(x, params))

    assert out.shape == (B, 2)
    assert jnp.allclose(out, ref, rtol=1e-4, atol=1e-5), (out, ref)
    # PrintSize modules are host-side print no-ops; nothing to compute.
    print("KERNEL_OK")
</pallas_src>

<mosaic_0001>
module attributes {stable_mosaic.version = 11 : i64} {
  func.func @cnn3_kernel(%arg0: memref<84x252xf32, #tpu.memory_space<vmem>>, %arg1: memref<84x84xf32, #tpu.memory_space<vmem>>, %arg2: memref<252x150xf32, #tpu.memory_space<vmem>>, %arg3: memref<25x350xf32, #tpu.memory_space<vmem>>, %arg4: memref<28x350xf32, #tpu.memory_space<vmem>>, %arg5: memref<2x28xf32, #tpu.memory_space<vmem>>, %arg6: memref<9xf32, #tpu.memory_space<smem>>, %arg7: memref<1xf32, #tpu.memory_space<smem>>, %arg8: memref<1xf32, #tpu.memory_space<smem>>, %arg9: memref<1xf32, #tpu.memory_space<smem>>, %arg10: memref<350x2xf32, #tpu.memory_space<vmem>>, %arg11: memref<2xf32, #tpu.memory_space<smem>>, %arg12: memref<2x2xf32, #tpu.memory_space<vmem>>) attributes {dimension_semantics = [], scalar_prefetch = 0 : i64, scratch_operands = 0 : i64, tpu.core_type = #tpu.core_type<tc>} {
    %c0 = arith.constant 0 : index
    %c0_0 = arith.constant 0 : index
    %0 = vector.load %arg1[%c0, %c0_0] : memref<84x84xf32, #tpu.memory_space<vmem>>, vector<84x84xf32>
    %c0_1 = arith.constant 0 : index
    %c0_2 = arith.constant 0 : index
    %1 = vector.load %arg0[%c0_1, %c0_2] : memref<84x252xf32, #tpu.memory_space<vmem>>, vector<84x252xf32>
    %cst = arith.constant dense<0.000000e+00> : vector<84x252xf32>
    %2 = tpu.matmul %0, %1, %cst {dimension_numbers = #tpu.dot_dimension_numbers<[1], [0], [0], [1], [0, 0, 1, 1], [], []>} : vector<84x84xf32>, vector<84x252xf32>, vector<84x252xf32> -> vector<84x252xf32>
    %c0_3 = arith.constant 0 : index
    %c0_4 = arith.constant 0 : index
    %3 = vector.load %arg2[%c0_3, %c0_4] : memref<252x150xf32, #tpu.memory_space<vmem>>, vector<252x150xf32>
    %cst_5 = arith.constant dense<0.000000e+00> : vector<84x150xf32>
    %4 = tpu.matmul %2, %3, %cst_5 {dimension_numbers = #tpu.dot_dimension_numbers<[1], [0], [0], [1], [0, 0, 1, 1], [], []>} : vector<84x252xf32>, vector<252x150xf32>, vector<84x150xf32> -> vector<84x150xf32>
    %c0_6 = arith.constant 0 : index
    %5 = memref.load %arg6[%c0_6] : memref<9xf32, #tpu.memory_space<smem>>
    %6 = vector.extract_strided_slice %4 {offsets = [0, 0], sizes = [28, 50], strides = [1, 1]} : vector<84x150xf32> to vector<28x50xf32>
    %7 = vector.broadcast %5 : f32 to vector<28x50xf32>
    %8 = arith.mulf %7, %6 : vector<28x50xf32>
    %c1 = arith.constant 1 : index
    %9 = memref.load %arg6[%c1] : memref<9xf32, #tpu.memory_space<smem>>
    %10 = vector.extract_strided_slice %4 {offsets = [0, 50], sizes = [28, 50], strides = [1, 1]} : vector<84x150xf32> to vector<28x50xf32>
    %11 = vector.broadcast %9 : f32 to vector<28x50xf32>
    %12 = arith.mulf %11, %10 : vector<28x50xf32>
    %13 = arith.addf %8, %12 : vector<28x50xf32>
    %c2 = arith.constant 2 : index
    %14 = memref.load %arg6[%c2] : memref<9xf32, #tpu.memory_space<smem>>
    %15 = vector.extract_strided_slice %4 {offsets = [0, 100], sizes = [28, 50], strides = [1, 1]} : vector<84x150xf32> to vector<28x50xf32>
    %16 = vector.broadcast %14 : f32 to vector<28x50xf32>
    %17 = arith.mulf %16, %15 : vector<28x50xf32>
    %18 = arith.addf %13, %17 : vector<28x50xf32>
    %c3 = arith.constant 3 : index
    %19 = memref.load %arg6[%c3] : memref<9xf32, #tpu.memory_space<smem>>
    %20 = vector.extract_strided_slice %4 {offsets = [28, 0], sizes = [28, 50], strides = [1, 1]} : vector<84x150xf32> to vector<28x50xf32>
    %21 = vector.broadcast %19 : f32 to vector<28x50xf32>
    %22 = arith.mulf %21, %20 : vector<28x50xf32>
    %23 = arith.addf %18, %22 : vector<28x50xf32>
    %c4 = arith.constant 4 : index
    %24 = memref.load %arg6[%c4] : memref<9xf32, #tpu.memory_space<smem>>
    %25 = vector.extract_strided_slice %4 {offsets = [28, 50], sizes = [28, 50], strides = [1, 1]} : vector<84x150xf32> to vector<28x50xf32>
    %26 = vector.broadcast %24 : f32 to vector<28x50xf32>
    %27 = arith.mulf %26, %25 : vector<28x50xf32>
    %28 = arith.addf %23, %27 : vector<28x50xf32>
    %c5 = arith.constant 5 : index
    %29 = memref.load %arg6[%c5] : memref<9xf32, #tpu.memory_space<smem>>
    %30 = vector.extract_strided_slice %4 {offsets = [28, 100], sizes = [28, 50], strides = [1, 1]} : vector<84x150xf32> to vector<28x50xf32>
    %31 = vector.broadcast %29 : f32 to vector<28x50xf32>
    %32 = arith.mulf %31, %30 : vector<28x50xf32>
    %33 = arith.addf %28, %32 : vector<28x50xf32>
    %c6 = arith.constant 6 : index
    %34 = memref.load %arg6[%c6] : memref<9xf32, #tpu.memory_space<smem>>
    %35 = vector.extract_strided_slice %4 {offsets = [56, 0], sizes = [28, 50], strides = [1, 1]} : vector<84x150xf32> to vector<28x50xf32>
    %36 = vector.broadcast %34 : f32 to vector<28x50xf32>
    %37 = arith.mulf %36, %35 : vector<28x50xf32>
    %38 = arith.addf %33, %37 : vector<28x50xf32>
    %c7 = arith.constant 7 : index
    %39 = memref.load %arg6[%c7] : memref<9xf32, #tpu.memory_space<smem>>
    %40 = vector.extract_strided_slice %4 {offsets = [56, 50], sizes = [28, 50], strides = [1, 1]} : vector<84x150xf32> to vector<28x50xf32>
    %41 = vector.broadcast %39 : f32 to vector<28x50xf32>
    %42 = arith.mulf %41, %40 : vector<28x50xf32>
    %43 = arith.addf %38, %42 : vector<28x50xf32>
    %c8 = arith.constant 8 : index
    %44 = memref.load %arg6[%c8] : memref<9xf32, #tpu.memory_space<smem>>
    %45 = vector.extract_strided_slice %4 {offsets = [56, 100], sizes = [28, 50], strides = [1, 1]} : vector<84x150xf32> to vector<28x50xf32>
    %46 = vector.broadcast %44 : f32 to vector<28x50xf32>
    %47 = arith.mulf %46, %45 : vector<28x50xf32>
    %48 = arith.addf %43, %47 : vector<28x50xf32>
    %c0_7 = arith.constant 0 : index
    %49 = memref.load %arg7[%c0_7] : memref<1xf32, #tpu.memory_space<smem>>
    %50 = vector.broadcast %49 : f32 to vector<28x50xf32>
    %51 = arith.addf %48, %50 : vector<28x50xf32>
    %52 = vector.shape_cast %51 : vector<28x50xf32> to vector<1x28x50xf32>
    %cst_8 = arith.constant dense<0.000000e+00> : vector<1xf32>
    %53 = vector.multi_reduction <add>, %52, %cst_8 [1, 2] : vector<1x28x50xf32> to vector<1xf32>
    %54 = vector.shape_cast %53 : vector<1xf32> to vector<1x1x1xf32>
    %55 = vector.extract %54[0, 0, 0] : f32 from vector<1x1x1xf32>
    %cst_9 = arith.constant 1.400000e+03 : f32
    %56 = arith.divf %55, %cst_9 : f32
    %57 = vector.broadcast %56 : f32 to vector<28x50xf32>
    %58 = arith.subf %51, %57 : vector<28x50xf32>
    %59 = arith.mulf %58, %58 : vector<28x50xf32>
    %60 = vector.shape_cast %59 : vector<28x50xf32> to vector<1x28x50xf32>
    %cst_10 = arith.constant dense<0.000000e+00> : vector<1xf32>
    %61 = vector.multi_reduction <add>, %60, %cst_10 [1, 2] : vector<1x28x50xf32> to vector<1xf32>
    %62 = vector.shape_cast %61 : vector<1xf32> to vector<1x1x1xf32>
    %63 = vector.extract %62[0, 0, 0] : f32 from vector<1x1x1xf32>
    %cst_11 = arith.constant 1.400000e+03 : f32
    %64 = arith.divf %63, %cst_11 : f32
    %c0_12 = arith.constant 0 : index
    %65 = memref.load %arg8[%c0_12] : memref<1xf32, #tpu.memory_space<smem>>
    %cst_13 = arith.constant 9.99999974E-6 : f32
    %66 = arith.addf %64, %cst_13 : f32
    %67 = math.rsqrt %66 : f32
    %68 = arith.mulf %65, %67 : f32
    %69 = vector.broadcast %68 : f32 to vector<28x50xf32>
    %70 = arith.mulf %69, %58 : vector<28x50xf32>
    %c0_14 = arith.constant 0 : index
    %71 = memref.load %arg9[%c0_14] : memref<1xf32, #tpu.memory_space<smem>>
    %72 = vector.broadcast %71 : f32 to vector<28x50xf32>
    %73 = arith.addf %70, %72 : vector<28x50xf32>
    %cst_15 = arith.constant 0.000000e+00 : f32
    %74 = vector.broadcast %cst_15 : f32 to vector<28x50xf32>
    %75 = arith.cmpf ogt, %73, %74 : vector<28x50xf32>
    %76 = math.exp %73 : vector<28x50xf32>
    %cst_16 = arith.constant 1.000000e+00 : f32
    %77 = vector.broadcast %cst_16 : f32 to vector<28x50xf32>
    %78 = arith.subf %76, %77 : vector<28x50xf32>
    %79 = arith.select %75, %73, %78 : vector<28x50xi1>, vector<28x50xf32>
    %80 = vector.extract_strided_slice %79 {offsets = [0, 0], sizes = [28, 25], strides = [1, 1]} : vector<28x50xf32> to vector<28x25xf32>
    %81 = vector.extract_strided_slice %79 {offsets = [0, 25], sizes = [28, 25], strides = [1, 1]} : vector<28x50xf32> to vector<28x25xf32>
    %82 = arith.maximumf %80, %81 : vector<28x25xf32>
    %c0_17 = arith.constant 0 : index
    %c0_18 = arith.constant 0 : index
    %83 = vector.load %arg3[%c0_17, %c0_18] : memref<25x350xf32, #tpu.memory_space<vmem>>, vector<25x350xf32>
    %cst_19 = arith.constant dense<0.000000e+00> : vector<28x350xf32>
    %84 = tpu.matmul %82, %83, %cst_19 {dimension_numbers = #tpu.dot_dimension_numbers<[1], [0], [0], [1], [0, 0, 1, 1], [], []>} : vector<28x25xf32>, vector<25x350xf32>, vector<28x350xf32> -> vector<28x350xf32>
    %c0_20 = arith.constant 0 : index
    %c0_21 = arith.constant 0 : index
    %85 = vector.load %arg5[%c0_20, %c0_21] : memref<2x28xf32, #tpu.memory_space<vmem>>, vector<2x28xf32>
    %c0_22 = arith.constant 0 : index
    %c0_23 = arith.constant 0 : index
    %86 = vector.load %arg4[%c0_22, %c0_23] : memref<28x350xf32, #tpu.memory_space<vmem>>, vector<28x350xf32>
    %87 = arith.mulf %84, %86 : vector<28x350xf32>
    %cst_24 = arith.constant dense<0.000000e+00> : vector<2x350xf32>
    %88 = tpu.matmul %85, %87, %cst_24 {dimension_numbers = #tpu.dot_dimension_numbers<[1], [0], [0], [1], [0, 0, 1, 1], [], []>} : vector<2x28xf32>, vector<28x350xf32>, vector<2x350xf32> -> vector<2x350xf32>
    %c0_25 = arith.constant 0 : index
    %c0_26 = arith.constant 0 : index
    %89 = vector.load %arg10[%c0_25, %c0_26] : memref<350x2xf32, #tpu.memory_space<vmem>>, vector<350x2xf32>
    %cst_27 = arith.constant dense<0.000000e+00> : vector<2x2xf32>
    %90 = tpu.matmul %88, %89, %cst_27 {dimension_numbers = #tpu.dot_dimension_numbers<[1], [0], [0], [1], [0, 0, 1, 1], [], []>} : vector<2x350xf32>, vector<350x2xf32>, vector<2x2xf32> -> vector<2x2xf32>
    %91 = vector.extract_strided_slice %90 {offsets = [0, 0], sizes = [2, 1], strides = [1, 1]} : vector<2x2xf32> to vector<2x1xf32>
    %c0_28 = arith.constant 0 : index
    %92 = memref.load %arg11[%c0_28] : memref<2xf32, #tpu.memory_space<smem>>
    %93 = vector.broadcast %92 : f32 to vector<2x1xf32>
    %94 = arith.addf %91, %93 : vector<2x1xf32>
    %95 = vector.extract_strided_slice %90 {offsets = [0, 1], sizes = [2, 1], strides = [1, 1]} : vector<2x2xf32> to vector<2x1xf32>
    %c1_29 = arith.constant 1 : index
    %96 = memref.load %arg11[%c1_29] : memref<2xf32, #tpu.memory_space<smem>>
    %97 = vector.broadcast %96 : f32 to vector<2x1xf32>
    %98 = arith.addf %95, %97 : vector<2x1xf32>
    %99 = arith.maximumf %94, %98 : vector<2x1xf32>
    %100 = arith.subf %94, %99 : vector<2x1xf32>
    %101 = math.exp %100 : vector<2x1xf32>
    %102 = arith.subf %98, %99 : vector<2x1xf32>
    %103 = math.exp %102 : vector<2x1xf32>
    %104 = arith.addf %101, %103 : vector<2x1xf32>
    %cst_30 = arith.constant 1.000000e+00 : f32
    %105 = vector.broadcast %cst_30 : f32 to vector<2x1xf32>
    %106 = arith.divf %105, %104 : vector<2x1xf32>
    %107 = arith.mulf %101, %106 : vector<2x1xf32>
    %c0_31 = arith.constant 0 : index
    %c0_32 = arith.constant 0 : index
    %108 = vector.load %arg12[%c0_31, %c0_32] : memref<2x2xf32, #tpu.memory_space<vmem>>, vector<2x1xf32>
    tpu.vector_store %arg12[%c0_31, %c0_32], %107 {strides = array<i32>} : memref<2x2xf32, #tpu.memory_space<vmem>>, vector<2x1xf32>,
    %109 = arith.mulf %103, %106 : vector<2x1xf32>
    %c0_33 = arith.constant 0 : index
    %c1_34 = arith.constant 1 : index
    %110 = vector.load %arg12[%c0_33, %c1_34] : memref<2x2xf32, #tpu.memory_space<vmem>>, vector<2x1xf32>
    tpu.vector_store %arg12[%c0_33, %c1_34], %109 {strides = array<i32>} : memref<2x2xf32, #tpu.memory_space<vmem>>, vector<2x1xf32>,
    return
  }
}

</mosaic_0001>

<llo_original>
// kernel: cnn3_forward.1
$region0: #{cnn3_forward.1}
  #allocation0 [shape = 'u32[]', space=smem, size = 0x4, offset = 0x4, fixed_abs, tag = 'smem constant byte address 0x4 - core index']
  #allocation1 [shape = 'u32[144,128]{1,0:T(1,128)}', space=vmem, size = 0x12000, scoped, tag = 'internal scratch']
  #allocation2 [shape = 'f32[1]{0:T(128)S(6)}', space=smem, size = 0x200, scoped, tag = 'scoped memory for cnn3_forward.1']
  #allocation3 [shape = 'f32[1]{0:T(128)S(6)}', space=smem, size = 0x200, scoped, tag = 'scoped memory for cnn3_forward.1']
  #allocation4 [shape = 'f32[1]{0:T(128)S(6)}', space=smem, size = 0x200, scoped, tag = 'scoped memory for cnn3_forward.1']
  %s0 = inlined_call_operand.vmem [shape: f32[84,252], index: 0, kind: input, shape index: {}]
  %s1 = inlined_call_operand.vmem [shape: f32[84,84], index: 1, kind: input, shape index: {}]
  %s2 = inlined_call_operand.vmem [shape: f32[252,150], index: 2, kind: input, shape index: {}]
  %s3 = inlined_call_operand.vmem [shape: f32[25,350], index: 3, kind: input, shape index: {}]
  %s4 = inlined_call_operand.vmem [shape: f32[28,350], index: 4, kind: input, shape index: {}]
  %s5 = inlined_call_operand.vmem [shape: f32[2,28], index: 5, kind: input, shape index: {}]
  %s6 = inlined_call_operand.vmem [shape: f32[9], index: 6, kind: input, shape index: {}]
  %s7 = inlined_call_operand.<no memory space> [shape: f32[1], index: 7, kind: input, shape index: {}]
  %s8 = inlined_call_operand.<no memory space> [shape: f32[1], index: 8, kind: input, shape index: {}]
  %s9 = inlined_call_operand.<no memory space> [shape: f32[1], index: 9, kind: input, shape index: {}]
  %s10 = inlined_call_operand.vmem [shape: f32[350,2], index: 10, kind: input, shape index: {}]
  %s11 = inlined_call_operand.vmem [shape: f32[2], index: 11, kind: input, shape index: {}]
  %s12 = inlined_call_operand.hbm [shape: f32[2,2], index: 12, kind: output, shape index: {}]
  %s13 = sld [smem:[#allocation0]]
  $region66: #{cnn3_forward.1} parent=0
    _
  %s15 = ssub.s32 1, %s13
  %s16 = scalar_select 0, %s15, %s13
  %17 = sst [smem:[#allocation2]] %s7
  %18 = sst [smem:[#allocation3]] %s8
  %19 = sst [smem:[#allocation4]] %s9
  $region1: #{cnn3_forward.1} parent=0
    #allocation5 [shape = 'u8[512]{0}', space=smem, size = 0x200, scoped, tag = 'input window, operand 6, single buffered']
    #allocation6 [shape = 's32[1]{0}', space=sflag, size = 0x4, scoped, tag = 'scoped memory for cnn3_forward.1']
    #allocation7 [shape = 's32[1]{0}', space=sflag, size = 0x4, scoped, tag = 'scoped memory for cnn3_forward.1']
    #allocation8 [shape = 'u8[512]{0}', space=smem, size = 0x200, scoped, tag = 'input window, operand 11, single buffered']
    #allocation9 [shape = 's32[1]{0}', space=sflag, size = 0x4, scoped, tag = 'scoped memory for cnn3_forward.1']
    #allocation10 [shape = 'u8[1024]{0}', space=vmem, size = 0x400, scoped, tag = 'output window, operand 0, single buffered']
    %20 = vsyncpa [#allocation7], 0
    %21 = vsyncpa [#allocation9], 0
    %22 = vsyncpa [#allocation6], 0
    // Predicated region
    $region2: #{cnn3_forward.1} parent=1 // pred_check
      _
    $region3: #{cnn3_forward.1} parent=1 // pred_check_branch
      %24 = sbr.rel (0) target = $region5
    $region4: #{cnn3_forward.1} parent=1 // pred_region
      _
    $region5: #{cnn3_forward.1} parent=1 // pred_fallthru
      _
    // Predicated region
    $region6: #{cnn3_forward.1} parent=1 // pred_check
      _
    $region7: #{cnn3_forward.1} parent=1 // pred_check_branch
      %26 = sbr.rel (0) target = $region9
    $region8: #{cnn3_forward.1} parent=1 // pred_region
      _
    $region9: #{cnn3_forward.1} parent=1 // pred_fallthru
      _
    // Predicated region
    $region10: #{cnn3_forward.1} parent=1 // pred_check
      _
    $region11: #{cnn3_forward.1} parent=1 // pred_check_branch
      %28 = sbr.rel (0) target = $region13
    $region12: #{cnn3_forward.1} parent=1 // pred_region
      _
    $region13: #{cnn3_forward.1} parent=1 // pred_fallthru
      _
    // Predicated region
    $region14: #{cnn3_forward.1} parent=1 // pred_check
      _
    $region15: #{cnn3_forward.1} parent=1 // pred_check_branch
      %30 = sbr.rel (0) target = $region17
    $region16: #{cnn3_forward.1} parent=1 // pred_region
      _
    $region17: #{cnn3_forward.1} parent=1 // pred_fallthru
      _
    // Predicated region
    $region18: #{cnn3_forward.1} parent=1 // pred_check
      _
    $region19: #{cnn3_forward.1} parent=1 // pred_check_branch
      %32 = sbr.rel (0) target = $region21
    $region20: #{cnn3_forward.1} parent=1 // pred_region
      _
    $region21: #{cnn3_forward.1} parent=1 // pred_fallthru
      _
    // Predicated region
    $region22: #{cnn3_forward.1} parent=1 // pred_check
      _
    $region23: #{cnn3_forward.1} parent=1 // pred_check_branch
      %34 = sbr.rel (0) target = $region25
    $region24: #{cnn3_forward.1} parent=1 // pred_region
      _
    $region25: #{cnn3_forward.1} parent=1 // pred_fallthru
      _
    // Predicated region
    $region26: #{cnn3_forward.1} parent=1 // pred_check
      _
    $region27: #{cnn3_forward.1} parent=1 // pred_check_branch
      %36 = sbr.rel (0) target = $region29
    $region28: #{cnn3_forward.1} parent=1 // pred_region
      %s38 = ssub.s32 16, 16
      %39 = vsyncadd [#allocation7], %s38
      %s41 = sshll.u32 %s6, 4
      %s42 = int_to_ptr.vmem [resolvable:$true] %s41
      %44 = dma.vmem_to_smem %s42, 16, [#allocation5], [#allocation7]
    $region29: #{cnn3_forward.1} parent=1 // pred_fallthru
      _
    // Predicated region
    $region30: #{cnn3_forward.1} parent=1 // pred_check
      _
    $region31: #{cnn3_forward.1} parent=1 // pred_check_branch
      %46 = sbr.rel (0) target = $region33
    $region32: #{cnn3_forward.1} parent=1 // pred_region
      _
    $region33: #{cnn3_forward.1} parent=1 // pred_fallthru
      _
    // Predicated region
    $region34: #{cnn3_forward.1} parent=1 // pred_check
      _
    $region35: #{cnn3_forward.1} parent=1 // pred_check_branch
      %48 = sbr.rel (0) target = $region37
    $region36: #{cnn3_forward.1} parent=1 // pred_region
      _
    $region37: #{cnn3_forward.1} parent=1 // pred_fallthru
      _
    // Predicated region
    $region38: #{cnn3_forward.1} parent=1 // pred_check
      _
    $region39: #{cnn3_forward.1} parent=1 // pred_check_branch
      %50 = sbr.rel (0) target = $region41
    $region40: #{cnn3_forward.1} parent=1 // pred_region
      _
    $region41: #{cnn3_forward.1} parent=1 // pred_fallthru
      _
    // Predicated region
    $region42: #{cnn3_forward.1} parent=1 // pred_check
      _
    $region43: #{cnn3_forward.1} parent=1 // pred_check_branch
      %52 = sbr.rel (0) target = $region45
    $region44: #{cnn3_forward.1} parent=1 // pred_region
      _
    $region45: #{cnn3_forward.1} parent=1 // pred_fallthru
      _
    // Predicated region
    $region46: #{cnn3_forward.1} parent=1 // pred_check
      _
    $region47: #{cnn3_forward.1} parent=1 // pred_check_branch
      %54 = sbr.rel (0) target = $region49
    $region48: #{cnn3_forward.1} parent=1 // pred_region
      %s56 = ssub.s32 16, 16
      %57 = vsyncadd [#allocation9], %s56
      %s59 = sshll.u32 %s11, 4
      %s60 = int_to_ptr.vmem [resolvable:$true] %s59
      %62 = dma.vmem_to_smem %s60, 16, [#allocation8], [#allocation9]
    $region49: #{cnn3_forward.1} parent=1 // pred_fallthru
      _
    // Predicated region
    $region50: #{cnn3_forward.1} parent=1 // pred_check
      _
    $region51: #{cnn3_forward.1} parent=1 // pred_check_branch
      %64 = sbr.rel (0) target = $region53
    $region52: #{cnn3_forward.1} parent=1 // pred_region
      %65 = dma.done [#allocation7], 16
    $region53: #{cnn3_forward.1} parent=1 // pred_fallthru
      _
    // Predicated region
    $region54: #{cnn3_forward.1} parent=1 // pred_check
      _
    $region55: #{cnn3_forward.1} parent=1 // pred_check_branch
      %67 = sbr.rel (0) target = $region57
    $region56: #{cnn3_forward.1} parent=1 // pred_region
      %68 = dma.done [#allocation9], 16
    $region57: #{cnn3_forward.1} parent=1 // pred_fallthru
      _
    %69 = sfence
    %v70 = vld [vmem:[%s1] sm:$0xff]
    %v71 = vld [vmem:[%s1 + $0x8] sm:$0xff]
    %v72 = vld [vmem:[%s1 + $0x10] sm:$0xff]
    %v73 = vld [vmem:[%s1 + $0x18] sm:$0xff]
    %v74 = vld [vmem:[%s1 + $0x20] sm:$0xff]
    %v75 = vld [vmem:[%s1 + $0x28] sm:$0xff]
    %v76 = vld [vmem:[%s1 + $0x30] sm:$0xff]
    %v77 = vld [vmem:[%s1 + $0x38] sm:$0xff]
    %v78 = vld [vmem:[%s1 + $0x40] sm:$0xff]
    %v79 = vld [vmem:[%s1 + $0x48] sm:$0xff]
    %v80 = vld [vmem:[%s1 + $0x50] sm:$0xf]
    %v81 = vld [vmem:[%s0] sm:$0xff]
    %v82 = vld [vmem:[%s0 + $0x8] sm:$0xff]
    %v83 = vld [vmem:[%s0 + $0x10] sm:$0xff]
    %v84 = vld [vmem:[%s0 + $0x18] sm:$0xff]
    %v85 = vld [vmem:[%s0 + $0x20] sm:$0xff]
    %v86 = vld [vmem:[%s0 + $0x28] sm:$0xff]
    %v87 = vld [vmem:[%s0 + $0x30] sm:$0xff]
    %v88 = vld [vmem:[%s0 + $0x38] sm:$0xff]
    %v89 = vld [vmem:[%s0 + $0x40] sm:$0xff]
    %v90 = vld [vmem:[%s0 + $0x48] sm:$0xff]
    %v91 = vld [vmem:[%s0 + $0x50] sm:$0xff]
    %v92 = vld [vmem:[%s0 + $0x58] sm:$0xff]
    %v93 = vld [vmem:[%s0 + $0x60] sm:$0xff]
    %v94 = vld [vmem:[%s0 + $0x68] sm:$0xff]
    %v95 = vld [vmem:[%s0 + $0x70] sm:$0xff]
    %v96 = vld [vmem:[%s0 + $0x78] sm:$0xff]
    %v97 = vld [vmem:[%s0 + $0x80] sm:$0xff]
    %v98 = vld [vmem:[%s0 + $0x88] sm:$0xff]
    %v99 = vld [vmem:[%s0 + $0x90] sm:$0xff]
    %v100 = vld [vmem:[%s0 + $0x98] sm:$0xff]
    %v101 = vld [vmem:[%s0 + $0xa0] sm:$0xf]
    %v102 = vld [vmem:[%s0 + $0xa8] sm:$0xf]
    %vm103 = vcmask 687104
    %v105 = vsel %vm103, %v70, 0
    %v108 = vsel %vm103, %v71, 0
    %v111 = vsel %vm103, %v72, 0
    %v114 = vsel %vm103, %v73, 0
    %v117 = vsel %vm103, %v74, 0
    %v120 = vsel %vm103, %v75, 0
    %v123 = vsel %vm103, %v76, 0
    %v126 = vsel %vm103, %v77, 0
    %v129 = vsel %vm103, %v78, 0
    %v132 = vsel %vm103, %v79, 0
    %v135 = vsel %vm103, %v80, 0
    %vm137 = vcmask 1043456
    %v139 = vsel %vm137, %v101, 0
    %v142 = vsel %vm137, %v102, 0
    %144 = vmatprep.subr.mxu0 0.0
    %145 = vmatpush1.msra.mxu0 0.0
    %146 = vmatprep.subr.mxu0 0.0
    %147 = vmatpush1.msra.mxu0 0.0
    %148 = vmatprep.subr.mxu0 0.0
    %149 = vmatpush1.msra.mxu0 0.0
    %150 = vmatprep.subr.mxu0 0.0
    %151 = vmatpush1.msra.mxu0 0.0
    %152 = vmatprep.subr.mxu0 0.0
    %153 = vmatpush1.msra.mxu0 0.0
    %154 = vmatprep.subr.mxu0 %v142
    %155 = vmatpush1.msra.mxu0 %v139
    %156 = vmatprep.subr.mxu0 %v100
    %157 = vmatpush1.msra.mxu0 %v99
    %158 = vmatprep.subr.mxu0 %v98
    %159 = vmatpush1.msra.mxu0 %v97
    %160 = vmatprep.subr.mxu0 %v96
    %161 = vmatpush1.msra.mxu0 %v95
    %162 = vmatprep.subr.mxu0 %v94
    %163 = vmatpush1.msra.mxu0 %v93
    %164 = vmatprep.subr.mxu0 %v92
    %165 = vmatpush1.msra.mxu0 %v91
    %166 = vmatprep.subr.mxu0 %v90
    %167 = vmatpush1.msra.mxu0 %v89
    %168 = vmatprep.subr.mxu0 %v88
    %169 = vmatpush1.msra.mxu0 %v87
    %170 = vmatprep.subr.mxu0 %v86
    %171 = vmatpush1.msra.mxu0 %v85
    %172 = vmatprep.subr.mxu0 %v84
    %173 = vmatpush1.msra.mxu0 %v83
    %174 = vmatprep.subr.mxu0 %v82
    %175 = vmatpush1.msra.mxu0 %v81
    %176 = vmatprep.subr.mxu0 0.0
    %177 = vmatpush2.msra.mxu0 0.0
    %178 = vmatprep.subr.mxu0 0.0
    %179 = vmatpush2.msra.mxu0 0.0
    %180 = vmatprep.subr.mxu0 0.0
    %181 = vmatpush2.msra.mxu0 0.0
    %182 = vmatprep.subr.mxu0 0.0
    %183 = vmatpush2.msra.mxu0 0.0
    %184 = vmatprep.subr.mxu0 0.0
    %185 = vmatpush2.msra.mxu0 0.0
    %186 = vmatprep.subr.mxu0 0.0
    %187 = vmatpush2.msra.mxu0 0.0
    %188 = vmatprep.subr.mxu0 0.0
    %189 = vmatpush2.msra.mxu0 0.0
    %190 = vmatprep.subr.mxu0 0.0
    %191 = vmatpush2.msra.mxu0 0.0
    %192 = vmatprep.subr.mxu0 0.0
    %193 = vmatpush2.msra.mxu0 0.0
    %194 = vmatprep.subr.mxu0 0.0
    %195 = vmatpush2.msra.mxu0 0.0
    %196 = vmatprep.subr.mxu0 0.0
    %197 = vmatpush2.msra.mxu0 0.0
    %198 = vmatprep.subr.mxu0 0.0
    %199 = vmatpush2.msra.mxu0 0.0
    %200 = vmatprep.subr.mxu0 0.0
    %201 = vmatpush2.msra.mxu0 0.0
    %202 = vmatprep.subr.mxu0 0.0
    %203 = vmatpush2.msra.mxu0 0.0
    %204 = vmatprep.subr.mxu0 0.0
    %205 = vmatpush2.msra.mxu0 0.0
    %206 = vmatprep.subr.mxu0 0.0
    %207 = vmatpush2.msra.mxu0 0.0
    %208 = vmatprep.mubr.f32.mxu0 0.0
    %209 = vmatmul.mubr.f32.gmra.mxu0 %v105
    %v210 = vpop.f32.mrf.mxu0
    %v211 = vadd.f32 0.0, %v210
    %v212 = vpop.f32.mrf.mxu0
    %v213 = vadd.f32 0.0, %v212
    %214 = vmatprep.mubr.f32.mxu0 0.0
    %215 = vmatmul.mubr.f32.gmra.mxu0 %v108
    %v216 = vpop.f32.mrf.mxu0
    %v217 = vadd.f32 0.0, %v216
    %v218 = vpop.f32.mrf.mxu0
    %v219 = vadd.f32 0.0, %v218
    %220 = vmatprep.mubr.f32.mxu0 0.0
    %221 = vmatmul.mubr.f32.gmra.mxu0 %v111
    %v222 = vpop.f32.mrf.mxu0
    %v223 = vadd.f32 0.0, %v222
    %v224 = vpop.f32.mrf.mxu0
    %v225 = vadd.f32 0.0, %v224
    %226 = vmatprep.mubr.f32.mxu0 0.0
    %227 = vmatmul.mubr.f32.gmra.mxu0 %v114
    %v228 = vpop.f32.mrf.mxu0
    %v229 = vadd.f32 0.0, %v228
    %v230 = vpop.f32.mrf.mxu0
    %v231 = vadd.f32 0.0, %v230
    %232 = vmatprep.mubr.f32.mxu0 0.0
    %233 = vmatmul.mubr.f32.gmra.mxu0 %v117
    %v234 = vpop.f32.mrf.mxu0
    %v235 = vadd.f32 0.0, %v234
    %v236 = vpop.f32.mrf.mxu0
    %v237 = vadd.f32 0.0, %v236
    %238 = vmatprep.mubr.f32.mxu0 0.0
    %239 = vmatmul.mubr.f32.gmra.mxu0 %v120
    %v240 = vpop.f32.mrf.mxu0
    %v241 = vadd.f32 0.0, %v240
    %v242 = vpop.f32.mrf.mxu0
    %v243 = vadd.f32 0.0, %v242
    %244 = vmatprep.mubr.f32.mxu0 0.0
    %245 = vmatmul.mubr.f32.gmra.mxu0 %v123
    %v246 = vpop.f32.mrf.mxu0
    %v247 = vadd.f32 0.0, %v246
    %v248 = vpop.f32.mrf.mxu0
    %v249 = vadd.f32 0.0, %v248
    %250 = vmatprep.mubr.f32.mxu0 0.0
    %251 = vmatmul.mubr.f32.gmra.mxu0 %v126
    %v252 = vpop.f32.mrf.mxu0
    %v253 = vadd.f32 0.0, %v252
    %v254 = vpop.f32.mrf.mxu0
    %v255 = vadd.f32 0.0, %v254
    %256 = vmatprep.mubr.f32.mxu0 0.0
    %257 = vmatmul.mubr.f32.gmra.mxu0 %v129
    %v258 = vpop.f32.mrf.mxu0
    %v259 = vadd.f32 0.0, %v258
    %v260 = vpop.f32.mrf.mxu0
    %v261 = vadd.f32 0.0, %v260
    %262 = vmatprep.mubr.f32.mxu0 0.0
    %263 = vmatmul.mubr.f32.gmra.mxu0 %v132
    %v264 = vpop.f32.mrf.mxu0
    %v265 = vadd.f32 0.0, %v264
    %v266 = vpop.f32.mrf.mxu0
    %v267 = vadd.f32 0.0, %v266
    %268 = vmatprep.mubr.f32.mxu0 0.0
    %269 = vmatmul.mubr.f32.gmra.mxu0 %v135
    %v270 = vpop.f32.mrf.mxu0
    %v271 = vadd.f32 0.0, %v270
    %v272 = vpop.f32.mrf.mxu0
    %v273 = vadd.f32 0.0, %v272
    %274 = vdwg.mxu0
    %v275 = vld [vmem:[%s2] sm:$0xff]
    %v276 = vld [vmem:[%s2 + $0x8] sm:$0xff]
    %v277 = vld [vmem:[%s2 + $0x10] sm:$0xff]
    %v278 = vld [vmem:[%s2 + $0x18] sm:$0xff]
    %v279 = vld [vmem:[%s2 + $0x20] sm:$0xff]
    %v280 = vld [vmem:[%s2 + $0x28] sm:$0xff]
    %v281 = vld [vmem:[%s2 + $0x30] sm:$0xff]
    %v282 = vld [vmem:[%s2 + $0x38] sm:$0xff]
    %v283 = vld [vmem:[%s2 + $0x40] sm:$0xff]
    %v284 = vld [vmem:[%s2 + $0x48] sm:$0xff]
    %v285 = vld [vmem:[%s2 + $0x50] sm:$0xff]
    %v286 = vld [vmem:[%s2 + $0x58] sm:$0xff]
    %v287 = vld [vmem:[%s2 + $0x60] sm:$0xff]
    %v288 = vld [vmem:[%s2 + $0x68] sm:$0xff]
    %v289 = vld [vmem:[%s2 + $0x70] sm:$0xff]
    %v290 = vld [vmem:[%s2 + $0x78] sm:$0xff]
    %v291 = vld [vmem:[%s2 + $0x80] sm:$0xff]
    %v292 = vld [vmem:[%s2 + $0x88] sm:$0xff]
    %v293 = vld [vmem:[%s2 + $0x90] sm:$0xff]
    %v294 = vld [vmem:[%s2 + $0x98] sm:$0xff]
    %v295 = vld [vmem:[%s2 + $0xa0] sm:$0xff]
    %v296 = vld [vmem:[%s2 + $0xa8] sm:$0xff]
    %v297 = vld [vmem:[%s2 + $0xb0] sm:$0xff]
    %v298 = vld [vmem:[%s2 + $0xb8] sm:$0xff]
    %v299 = vld [vmem:[%s2 + $0xc0] sm:$0xff]
    %v300 = vld [vmem:[%s2 + $0xc8] sm:$0xff]
    %v301 = vld [vmem:[%s2 + $0xd0] sm:$0xff]
    %v302 = vld [vmem:[%s2 + $0xd8] sm:$0xff]
    %v303 = vld [vmem:[%s2 + $0xe0] sm:$0xff]
    %v304 = vld [vmem:[%s2 + $0xe8] sm:$0xff]
    %v305 = vld [vmem:[%s2 + $0xf0] sm:$0xff]
    %v306 = vld [vmem:[%s2 + $0xf8] sm:$0xff]
    %v307 = vld [vmem:[%s2 + $0x100] sm:$0xff]
    %v308 = vld [vmem:[%s2 + $0x108] sm:$0xff]
    %v309 = vld [vmem:[%s2 + $0x110] sm:$0xff]
    %v310 = vld [vmem:[%s2 + $0x118] sm:$0xff]
    %v311 = vld [vmem:[%s2 + $0x120] sm:$0xff]
    %v312 = vld [vmem:[%s2 + $0x128] sm:$0xff]
    %v313 = vld [vmem:[%s2 + $0x130] sm:$0xff]
    %v314 = vld [vmem:[%s2 + $0x138] sm:$0xff]
    %v315 = vld [vmem:[%s2 + $0x140] sm:$0xff]
    %v316 = vld [vmem:[%s2 + $0x148] sm:$0xff]
    %v317 = vld [vmem:[%s2 + $0x150] sm:$0xff]
    %v318 = vld [vmem:[%s2 + $0x158] sm:$0xff]
    %v319 = vld [vmem:[%s2 + $0x160] sm:$0xff]
    %v320 = vld [vmem:[%s2 + $0x168] sm:$0xff]
    %v321 = vld [vmem:[%s2 + $0x170] sm:$0xff]
    %v322 = vld [vmem:[%s2 + $0x178] sm:$0xff]
    %v323 = vld [vmem:[%s2 + $0x180] sm:$0xff]
    %v324 = vld [vmem:[%s2 + $0x188] sm:$0xff]
    %v325 = vld [vmem:[%s2 + $0x190] sm:$0xff]
    %v326 = vld [vmem:[%s2 + $0x198] sm:$0xff]
    %v327 = vld [vmem:[%s2 + $0x1a0] sm:$0xff]
    %v328 = vld [vmem:[%s2 + $0x1a8] sm:$0xff]
    %v329 = vld [vmem:[%s2 + $0x1b0] sm:$0xff]
    %v330 = vld [vmem:[%s2 + $0x1b8] sm:$0xff]
    %v331 = vld [vmem:[%s2 + $0x1c0] sm:$0xff]
    %v332 = vld [vmem:[%s2 + $0x1c8] sm:$0xff]
    %v333 = vld [vmem:[%s2 + $0x1d0] sm:$0xff]
    %v334 = vld [vmem:[%s2 + $0x1d8] sm:$0xff]
    %v335 = vld [vmem:[%s2 + $0x1e0] sm:$0xff]
    %v336 = vld [vmem:[%s2 + $0x1e8] sm:$0xff]
    %v337 = vld [vmem:[%s2 + $0x1f0] sm:$0xf]
    %v338 = vld [vmem:[%s2 + $0x1f8] sm:$0xf]
    %vm339 = vcmask 1014784
    %v341 = vsel %vm339, %v213, 0
    %v344 = vsel %vm339, %v219, 0
    %v347 = vsel %vm339, %v225, 0
    %v350 = vsel %vm339, %v231, 0
    %v353 = vsel %vm339, %v237, 0
    %v356 = vsel %vm339, %v243, 0
    %v359 = vsel %vm339, %v249, 0
    %v362 = vsel %vm339, %v255, 0
    %v365 = vsel %vm339, %v261, 0
    %v368 = vsel %vm339, %v267, 0
    %v371 = vsel %vm339, %v273, 0
    %v374 = vsel %vm137, %v337, 0
    %v377 = vsel %vm137, %v338, 0
    %379 = vmatprep.subr.mxu0 %v306
    %380 = vmatpush1.msra.mxu0 %v305
    %381 = vmatprep.subr.mxu0 %v304
    %382 = vmatpush1.msra.mxu0 %v303
    %383 = vmatprep.subr.mxu0 %v302
    %384 = vmatpush1.msra.mxu0 %v301
    %385 = vmatprep.subr.mxu0 %v300
    %386 = vmatpush1.msra.mxu0 %v299
    %387 = vmatprep.subr.mxu0 %v298
    %388 = vmatpush1.msra.mxu0 %v297
    %389 = vmatprep.subr.mxu0 %v296
    %390 = vmatpush1.msra.mxu0 %v295
    %391 = vmatprep.subr.mxu0 %v294
    %392 = vmatpush1.msra.mxu0 %v293
    %393 = vmatprep.subr.mxu0 %v292
    %394 = vmatpush1.msra.mxu0 %v291
    %395 = vmatprep.subr.mxu0 %v290
    %396 = vmatpush1.msra.mxu0 %v289
    %397 = vmatprep.subr.mxu0 %v288
    %398 = vmatpush1.msra.mxu0 %v287
    %399 = vmatprep.subr.mxu0 %v286
    %400 = vmatpush1.msra.mxu0 %v285
    %401 = vmatprep.subr.mxu0 %v284
    %402 = vmatpush1.msra.mxu0 %v283
    %403 = vmatprep.subr.mxu0 %v282
    %404 = vmatpush1.msra.mxu0 %v281
    %405 = vmatprep.subr.mxu0 %v280
    %406 = vmatpush1.msra.mxu0 %v279
    %407 = vmatprep.subr.mxu0 %v278
    %408 = vmatpush1.msra.mxu0 %v277
    %409 = vmatprep.subr.mxu0 %v276
    %410 = vmatpush1.msra.mxu0 %v275
    %411 = vmatprep.subr.mxu0 %v377
    %412 = vmatpush2.msra.mxu0 %v374
    %413 = vmatprep.subr.mxu0 %v336
    %414 = vmatpush2.msra.mxu0 %v335
    %415 = vmatprep.subr.mxu0 %v334
    %416 = vmatpush2.msra.mxu0 %v333
    %417 = vmatprep.subr.mxu0 %v332
    %418 = vmatpush2.msra.mxu0 %v331
    %419 = vmatprep.subr.mxu0 %v330
    %420 = vmatpush2.msra.mxu0 %v329
    %421 = vmatprep.subr.mxu0 %v328
    %422 = vmatpush2.msra.mxu0 %v327
    %423 = vmatprep.subr.mxu0 %v326
    %424 = vmatpush2.msra.mxu0 %v325
    %425 = vmatprep.subr.mxu0 %v324
    %426 = vmatpush2.msra.mxu0 %v323
    %427 = vmatprep.subr.mxu0 %v322
    %428 = vmatpush2.msra.mxu0 %v321
    %429 = vmatprep.subr.mxu0 %v320
    %430 = vmatpush2.msra.mxu0 %v319
    %431 = vmatprep.subr.mxu0 %v318
    %432 = vmatpush2.msra.mxu0 %v317
    %433 = vmatprep.subr.mxu0 %v316
    %434 = vmatpush2.msra.mxu0 %v315
    %435 = vmatprep.subr.mxu0 %v314
    %436 = vmatpush2.msra.mxu0 %v313
    %437 = vmatprep.subr.mxu0 %v312
    %438 = vmatpush2.msra.mxu0 %v311
    %439 = vmatprep.subr.mxu0 %v310
    %440 = vmatpush2.msra.mxu0 %v309
    %441 = vmatprep.subr.mxu0 %v308
    %442 = vmatpush2.msra.mxu0 %v307
    %443 = vmatprep.mubr.f32.mxu0 %v341
    %444 = vmatmul.mubr.f32.gmra.mxu0 %v211
    %v445 = vpop.f32.mrf.mxu0
    %v446 = vadd.f32 0.0, %v445
    %v447 = vpop.f32.mrf.mxu0
    %v448 = vadd.f32 0.0, %v447
    %449 = vmatprep.mubr.f32.mxu0 %v344
    %450 = vmatmul.mubr.f32.gmra.mxu0 %v217
    %v451 = vpop.f32.mrf.mxu0
    %v452 = vadd.f32 0.0, %v451
    %v453 = vpop.f32.mrf.mxu0
    %v454 = vadd.f32 0.0, %v453
    %455 = vmatprep.mubr.f32.mxu0 %v347
    %456 = vmatmul.mubr.f32.gmra.mxu0 %v223
    %v457 = vpop.f32.mrf.mxu0
    %v458 = vadd.f32 0.0, %v457
    %v459 = vpop.f32.mrf.mxu0
    %v460 = vadd.f32 0.0, %v459
    %461 = vmatprep.mubr.f32.mxu0 %v350
    %462 = vmatmul.mubr.f32.gmra.mxu0 %v229
    %v463 = vpop.f32.mrf.mxu0
    %v464 = vadd.f32 0.0, %v463
    %v465 = vpop.f32.mrf.mxu0
    %v466 = vadd.f32 0.0, %v465
    %467 = vmatprep.mubr.f32.mxu0 %v353
    %468 = vmatmul.mubr.f32.gmra.mxu0 %v235
    %v469 = vpop.f32.mrf.mxu0
    %v470 = vadd.f32 0.0, %v469
    %v471 = vpop.f32.mrf.mxu0
    %v472 = vadd.f32 0.0, %v471
    %473 = vmatprep.mubr.f32.mxu0 %v356
    %474 = vmatmul.mubr.f32.gmra.mxu0 %v241
    %v475 = vpop.f32.mrf.mxu0
    %v476 = vadd.f32 0.0, %v475
    %v477 = vpop.f32.mrf.mxu0
    %v478 = vadd.f32 0.0, %v477
    %479 = vmatprep.mubr.f32.mxu0 %v359
    %480 = vmatmul.mubr.f32.gmra.mxu0 %v247
    %v481 = vpop.f32.mrf.mxu0
    %v482 = vadd.f32 0.0, %v481
    %v483 = vpop.f32.mrf.mxu0
    %v484 = vadd.f32 0.0, %v483
    %485 = vmatprep.mubr.f32.mxu0 %v362
    %486 = vmatmul.mubr.f32.gmra.mxu0 %v253
    %v487 = vpop.f32.mrf.mxu0
    %v488 = vadd.f32 0.0, %v487
    %v489 = vpop.f32.mrf.mxu0
    %v490 = vadd.f32 0.0, %v489
    %491 = vmatprep.mubr.f32.mxu0 %v365
    %492 = vmatmul.mubr.f32.gmra.mxu0 %v259
    %v493 = vpop.f32.mrf.mxu0
    %v494 = vadd.f32 0.0, %v493
    %v495 = vpop.f32.mrf.mxu0
    %v496 = vadd.f32 0.0, %v495
    %497 = vmatprep.mubr.f32.mxu0 %v368
    %498 = vmatmul.mubr.f32.gmra.mxu0 %v265
    %v499 = vpop.f32.mrf.mxu0
    %v500 = vadd.f32 0.0, %v499
    %v501 = vpop.f32.mrf.mxu0
    %v502 = vadd.f32 0.0, %v501
    %503 = vmatprep.mubr.f32.mxu0 %v371
    %504 = vmatmul.mubr.f32.gmra.mxu0 %v271
    %v505 = vpop.f32.mrf.mxu0
    %v506 = vadd.f32 0.0, %v505
    %v507 = vpop.f32.mrf.mxu0
    %v508 = vadd.f32 0.0, %v507
    %509 = vdwg.mxu0
    %s510 = sld [smem:[#allocation5]]
    %v511 = vstv %s510
    %v512 = vmul.f32 %v511, %v446
    %v513 = vmul.f32 %v511, %v452
    %v514 = vmul.f32 %v511, %v458
    %v515 = vmul.f32 %v511, %v464
    %s516 = sld [smem:[#allocation5 + $0x1]]
    %v517 = vstv %s516
    %v518 = vmul.f32 %v517, %v446
    %v519 = vmul.f32 %v517, %v452
    %v520 = vmul.f32 %v517, %v458
    %v521 = vmul.f32 %v517, %v464
    %526 = vrot.lane.b32.xlu0 %v518, 78
    %v527 = vpop.permute.xlu0 %526
    %528 = vrot.lane.b32.xlu0 %v519, 78
    %v529 = vpop.permute.xlu0 %528
    %530 = vrot.lane.b32.xlu0 %v520, 78
    %v531 = vpop.permute.xlu0 %530
    %532 = vrot.lane.b32.xlu0 %v521, 78
    %v533 = vpop.permute.xlu0 %532
    %v538 = vadd.f32 %v512, %v527
    %v539 = vadd.f32 %v513, %v529
    %v540 = vadd.f32 %v514, %v531
    %v541 = vadd.f32 %v515, %v533
    %s542 = sld [smem:[#allocation5 + $0x2]]
    %v543 = vstv %s542
    %v544 = vmul.f32 %v543, %v446
    %v545 = vmul.f32 %v543, %v448
    %v546 = vmul.f32 %v543, %v452
    %v547 = vmul.f32 %v543, %v454
    %v548 = vmul.f32 %v543, %v458
    %v549 = vmul.f32 %v543, %v460
    %v550 = vmul.f32 %v543, %v464
    %v551 = vmul.f32 %v543, %v466
    %560 = vrot.lane.b32.xlu0 %v544, 28
    %v561 = vpop.permute.xlu0 %560
    %562 = vrot.lane.b32.xlu0 %v545, 28
    %v563 = vpop.permute.xlu0 %562
    %564 = vrot.lane.b32.xlu0 %v546, 28
    %v565 = vpop.permute.xlu0 %564
    %566 = vrot.lane.b32.xlu0 %v547, 28
    %v567 = vpop.permute.xlu0 %566
    %568 = vrot.lane.b32.xlu0 %v548, 28
    %v569 = vpop.permute.xlu0 %568
    %570 = vrot.lane.b32.xlu0 %v549, 28
    %v571 = vpop.permute.xlu0 %570
    %572 = vrot.lane.b32.xlu0 %v550, 28
    %v573 = vpop.permute.xlu0 %572
    %574 = vrot.lane.b32.xlu0 %v551, 28
    %v575 = vpop.permute.xlu0 %574
    %vm576 = vcmask 228352
    %v577 = vsel %vm576, %v561, %v563
    %v578 = vsel %vm576, %v565, %v567
    %v579 = vsel %vm576, %v569, %v571
    %v580 = vsel %vm576, %v573, %v575
    %v585 = vadd.f32 %v538, %v577
    %v586 = vadd.f32 %v539, %v578
    %v587 = vadd.f32 %v540, %v579
    %v588 = vadd.f32 %v541, %v580
    %s589 = sld [smem:[#allocation5 + $0x3]]
    %v590 = vstv %s589
    %v591 = vmul.f32 %v590, %v464
    %v592 = vmul.f32 %v590, %v470
    %v593 = vmul.f32 %v590, %v476
    %v594 = vmul.f32 %v590, %v482
    %v599 = vrot.slane %v591, 4
    %v600 = vrot.slane %v592, 4
    %v601 = vsel %vm137, %v599, %v600
    %v602 = vrot.slane %v593, 4
    %v603 = vsel %vm137, %v600, %v602
    %v604 = vrot.slane %v594, 4
    %v605 = vsel %vm137, %v602, %v604
    %v610 = vadd.f32 %v585, %v601
    %v611 = vadd.f32 %v586, %v603
    %v612 = vadd.f32 %v587, %v605
    %v613 = vadd.f32 %v588, %v604
    %s614 = sld [smem:[#allocation5 + $0x4]]
    %v615 = vstv %s614
    %v616 = vmul.f32 %v615, %v464
    %v617 = vmul.f32 %v615, %v470
    %v618 = vmul.f32 %v615, %v476
    %v619 = vmul.f32 %v615, %v482
    %v624 = vrot.slane %v616, 4
    %v625 = vrot.slane %v617, 4
    %v626 = vsel %vm137, %v624, %v625
    %v627 = vrot.slane %v618, 4
    %v628 = vsel %vm137, %v625, %v627
    %v629 = vrot.slane %v619, 4
    %v630 = vsel %vm137, %v627, %v629
    %631 = vrot.lane.b32.xlu0 %v626, 78
    %v632 = vpop.permute.xlu0 %631
    %633 = vrot.lane.b32.xlu0 %v628, 78
    %v634 = vpop.permute.xlu0 %633
    %635 = vrot.lane.b32.xlu0 %v630, 78
    %v636 = vpop.permute.xlu0 %635
    %637 = vrot.lane.b32.xlu0 %v629, 78
    %v638 = vpop.permute.xlu0 %637
    %v643 = vadd.f32 %v610, %v632
    %v644 = vadd.f32 %v611, %v634
    %v645 = vadd.f32 %v612, %v636
    %v646 = vadd.f32 %v613, %v638
    %s647 = sld [smem:[#allocation5 + $0x5]]
    %v648 = vstv %s647
    %v649 = vmul.f32 %v648, %v464
    %v650 = vmul.f32 %v648, %v466
    %v651 = vmul.f32 %v648, %v470
    %v652 = vmul.f32 %v648, %v472
    %v653 = vmul.f32 %v648, %v476
    %v654 = vmul.f32 %v648, %v478
    %v655 = vmul.f32 %v648, %v482
    %v656 = vmul.f32 %v648, %v484
    %v665 = vrot.slane %v649, 4
    %v666 = vrot.slane %v651, 4
    %v667 = vsel %vm137, %v665, %v666
    %v668 = vrot.slane %v650, 4
    %v669 = vrot.slane %v652, 4
    %v670 = vsel %vm137, %v668, %v669
    %v671 = vrot.slane %v653, 4
    %v672 = vsel %vm137, %v666, %v671
    %v673 = vrot.slane %v654, 4
    %v674 = vsel %vm137, %v669, %v673
    %v675 = vrot.slane %v655, 4
    %v676 = vsel %vm137, %v671, %v675
    %v677 = vrot.slane %v656, 4
    %v678 = vsel %vm137, %v673, %v677
    %679 = vrot.lane.b32.xlu0 %v667, 28
    %v680 = vpop.permute.xlu0 %679
    %681 = vrot.lane.b32.xlu0 %v670, 28
    %v682 = vpop.permute.xlu0 %681
    %683 = vrot.lane.b32.xlu0 %v672, 28
    %v684 = vpop.permute.xlu0 %683
    %685 = vrot.lane.b32.xlu0 %v674, 28
    %v686 = vpop.permute.xlu0 %685
    %687 = vrot.lane.b32.xlu0 %v676, 28
    %v688 = vpop.permute.xlu0 %687
    %689 = vrot.lane.b32.xlu0 %v678, 28
    %v690 = vpop.permute.xlu0 %689
    %691 = vrot.lane.b32.xlu0 %v675, 28
    %v692 = vpop.permute.xlu0 %691
    %693 = vrot.lane.b32.xlu0 %v677, 28
    %v694 = vpop.permute.xlu0 %693
    %v695 = vsel %vm576, %v680, %v682
    %v696 = vsel %vm576, %v684, %v686
    %v697 = vsel %vm576, %v688, %v690
    %v698 = vsel %vm576, %v692, %v694
    %v703 = vadd.f32 %v643, %v695
    %v704 = vadd.f32 %v644, %v696
    %v705 = vadd.f32 %v645, %v697
    %v706 = vadd.f32 %v646, %v698
    %s707 = sld [smem:[#allocation5 + $0x6]]
    %v708 = vstv %s707
    %v709 = vmul.f32 %v708, %v488
    %v710 = vmul.f32 %v708, %v494
    %v711 = vmul.f32 %v708, %v500
    %v712 = vmul.f32 %v708, %v506
    %v713 = vadd.f32 %v703, %v709
    %v714 = vadd.f32 %v704, %v710
    %v715 = vadd.f32 %v705, %v711
    %v716 = vadd.f32 %v706, %v712
    %s717 = sld [smem:[#allocation5 + $0x7]]
    %v718 = vstv %s717
    %v719 = vmul.f32 %v718, %v488
    %v720 = vmul.f32 %v718, %v494
    %v721 = vmul.f32 %v718, %v500
    %v722 = vmul.f32 %v718, %v506
    %727 = vrot.lane.b32.xlu0 %v719, 78
    %v728 = vpop.permute.xlu0 %727
    %729 = vrot.lane.b32.xlu0 %v720, 78
    %v730 = vpop.permute.xlu0 %729
    %731 = vrot.lane.b32.xlu0 %v721, 78
    %v732 = vpop.permute.xlu0 %731
    %733 = vrot.lane.b32.xlu0 %v722, 78
    %v734 = vpop.permute.xlu0 %733
    %v739 = vadd.f32 %v713, %v728
    %v740 = vadd.f32 %v714, %v730
    %v741 = vadd.f32 %v715, %v732
    %v742 = vadd.f32 %v716, %v734
    %s743 = sld [smem:[#allocation5 + $0x8]]
    %v744 = vstv %s743
    %v745 = vmul.f32 %v744, %v488
    %v746 = vmul.f32 %v744, %v490
    %v747 = vmul.f32 %v744, %v494
    %v748 = vmul.f32 %v744, %v496
    %v749 = vmul.f32 %v744, %v500
    %v750 = vmul.f32 %v744, %v502
    %v751 = vmul.f32 %v744, %v506
    %v752 = vmul.f32 %v744, %v508
    %761 = vrot.lane.b32.xlu0 %v745, 28
    %v762 = vpop.permute.xlu0 %761
    %763 = vrot.lane.b32.xlu0 %v746, 28
    %v764 = vpop.permute.xlu0 %763
    %765 = vrot.lane.b32.xlu0 %v747, 28
    %v766 = vpop.permute.xlu0 %765
    %767 = vrot.lane.b32.xlu0 %v748, 28
    %v768 = vpop.permute.xlu0 %767
    %769 = vrot.lane.b32.xlu0 %v749, 28
    %v770 = vpop.permute.xlu0 %769
    %771 = vrot.lane.b32.xlu0 %v750, 28
    %v772 = vpop.permute.xlu0 %771
    %773 = vrot.lane.b32.xlu0 %v751, 28
    %v774 = vpop.permute.xlu0 %773
    %775 = vrot.lane.b32.xlu0 %v752, 28
    %v776 = vpop.permute.xlu0 %775
    %v777 = vsel %vm576, %v762, %v764
    %v778 = vsel %vm576, %v766, %v768
    %v779 = vsel %vm576, %v770, %v772
    %v780 = vsel %vm576, %v774, %v776
    %v785 = vadd.f32 %v739, %v777
    %v786 = vadd.f32 %v740, %v778
    %v787 = vadd.f32 %v741, %v779
    %v788 = vadd.f32 %v742, %v780
    %s789 = sld [smem:[#allocation2]]
    %v790 = vstv %s789
    %v791 = vadd.f32 %v785, %v790
    %v792 = vadd.f32 %v786, %v790
    %v793 = vadd.f32 %v787, %v790
    %v794 = vadd.f32 %v788, %v790
    %vm795 = vcmask 408576
    %v796 = vsel %vm795, %v791, 0.0
    %v797 = vsel %vm795, %v792, 0.0
    %v798 = vadd.f32 %v796, %v797
    %v799 = vsel %vm795, %v793, 0.0
    %v800 = vadd.f32 %v798, %v799
    %vm801 = vcmask 404480
    %v802 = vsel %vm801, %v794, 0.0
    %v803 = vadd.f32 %v800, %v802
    %804 = vadd.xlane.f32.xlu0 %v803
    %v805 = vpop.xlane.xlu0 %804
    %v806 = vrot.slane %v805, 4
    %v807 = vadd.f32 %v805, %v806
    %v808 = vrot.slane %v807, 2
    %v809 = vadd.f32 %v807, %v808
    %v810 = vrot.slane %v809, 1
    %v811 = vadd.f32 %v809, %v810
    %s812 = vtos %v811
    %v813 = vrcp.pop 1400.0
    %s814 = vtos %v813
    %s815 = smul.f32 %s812, %s814
    %v816 = vstv %s815
    %v817 = vsub.f32 %v791, %v816
    %v818 = vsub.f32 %v792, %v816
    %v819 = vsub.f32 %v793, %v816
    %v820 = vsub.f32 %v794, %v816
    %v821 = vmul.f32 %v817, %v817
    %v822 = vmul.f32 %v818, %v818
    %v823 = vmul.f32 %v819, %v819
    %v824 = vmul.f32 %v820, %v820
    %v825 = vsel %vm795, %v821, 0.0
    %v826 = vsel %vm795, %v822, 0.0
    %v827 = vadd.f32 %v825, %v826
    %v828 = vsel %vm795, %v823, 0.0
    %v829 = vadd.f32 %v827, %v828
    %v830 = vsel %vm801, %v824, 0.0
    %v831 = vadd.f32 %v829, %v830
    %832 = vadd.xlane.f32.xlu0 %v831
    %v833 = vpop.xlane.xlu0 %832
    %v834 = vrot.slane %v833, 4
    %v835 = vadd.f32 %v833, %v834
    %v836 = vrot.slane %v835, 2
    %v837 = vadd.f32 %v835, %v836
    %v838 = vrot.slane %v837, 1
    %v839 = vadd.f32 %v837, %v838
    %s840 = vtos %v839
    %v841 = vrcp.pop 1400.0
    %s842 = vtos %v841
    %s843 = smul.f32 %s840, %s842
    %s844 = sld [smem:[#allocation3]]
    %s845 = sadd.f32 %s843, 1e-05
    %v846 = vstv %s845
    %v847 = vrsqrt.pop %v846
    %s848 = vtos %v847
    %s849 = smul.f32 %s844, %s848
    %v850 = vstv %s849
    %v851 = vmul.f32 %v850, %v817
    %v852 = vmul.f32 %v850, %v818
    %v853 = vmul.f32 %v850, %v819
    %v854 = vmul.f32 %v850, %v820
    %s855 = sld [smem:[#allocation4]]
    %v856 = vstv %s855
    %v857 = vadd.f32 %v851, %v856
    %v858 = vadd.f32 %v852, %v856
    %v859 = vadd.f32 %v853, %v856
    %v860 = vadd.f32 %v854, %v856
    %vm861 = vcmp.gt.f32.partialorder %v857, 0.0
    %vm862 = vcmp.gt.f32.partialorder %v858, 0.0
    %vm863 = vcmp.gt.f32.partialorder %v859, 0.0
    %vm864 = vcmp.gt.f32.partialorder %v860, 0.0
    %v865 = vmul.f32 %v857, 1.442695
    %v866 = vpow.pop %v865
    %v867 = vmul.f32 %v858, 1.442695
    %v868 = vpow.pop %v867
    %v869 = vmul.f32 %v859, 1.442695
    %v870 = vpow.pop %v869
    %v871 = vmul.f32 %v860, 1.442695
    %v872 = vpow.pop %v871
    %v873 = vsub.f32 %v866, 1.0
    %v874 = vsub.f32 %v868, 1.0
    %v875 = vsub.f32 %v870, 1.0
    %v876 = vsub.f32 %v872, 1.0
    %v877 = vsel %vm861, %v857, %v873
    %v878 = vsel %vm862, %v858, %v874
    %v879 = vsel %vm863, %v859, %v875
    %v880 = vsel %vm864, %v860, %v876
    %885 = vrot.lane.b32.xlu0 %v877, 103
    %v886 = vpop.permute.xlu0 %885
    %887 = vrot.lane.b32.xlu0 %v878, 103
    %v888 = vpop.permute.xlu0 %887
    %889 = vrot.lane.b32.xlu0 %v879, 103
    %v890 = vpop.permute.xlu0 %889
    %891 = vrot.lane.b32.xlu0 %v880, 103
    %v892 = vpop.permute.xlu0 %891
    %v897 = vmax.f32 %v877, %v886
    %v898 = vmax.f32 %v878, %v888
    %v899 = vmax.f32 %v879, %v890
    %v900 = vmax.f32 %v880, %v892
    %v901 = vld [vmem:[%s3] sm:$0xff]
    %v902 = vld [vmem:[%s3 + $0x8] sm:$0xff]
    %v903 = vld [vmem:[%s3 + $0x10] sm:$0xff]
    %v904 = vld [vmem:[%s3 + $0x18] sm:$0xff]
    %v905 = vld [vmem:[%s3 + $0x20] sm:$0xff]
    %v906 = vld [vmem:[%s3 + $0x28] sm:$0xff]
    %v907 = vld [vmem:[%s3 + $0x30] sm:$0xff]
    %v908 = vld [vmem:[%s3 + $0x38] sm:$0xff]
    %v909 = vld [vmem:[%s3 + $0x40] sm:$0xff]
    %v910 = vld [vmem:[%s3 + $0x48] sm:$0x1]
    %v911 = vld [vmem:[%s3 + $0x50] sm:$0x1]
    %v912 = vld [vmem:[%s3 + $0x58] sm:$0x1]
    %vm913 = vcmask 203776
    %v915 = vsel %vm913, %v897, 0
    %v918 = vsel %vm913, %v898, 0
    %v921 = vsel %vm913, %v899, 0
    %v924 = vsel %vm913, %v900, 0
    %vm926 = vcmask 1040384
    %v928 = vsel %vm926, %v910, 0
    %v931 = vsel %vm926, %v911, 0
    %v934 = vsel %vm926, %v912, 0
    %936 = vmatprep.subr.mxu0 0.0
    %937 = vmatpush1.msra.mxu0 0.0
    %938 = vmatprep.subr.mxu0 0.0
    %939 = vmatpush1.msra.mxu0 0.0
    %940 = vmatprep.subr.mxu0 0.0
    %941 = vmatpush1.msra.mxu0 0.0
    %942 = vmatprep.subr.mxu0 0.0
    %943 = vmatpush1.msra.mxu0 0.0
    %944 = vmatprep.subr.mxu0 0.0
    %945 = vmatpush1.msra.mxu0 0.0
    %946 = vmatprep.subr.mxu0 0.0
    %947 = vmatpush1.msra.mxu0 0.0
    %948 = vmatprep.subr.mxu0 0.0
    %949 = vmatpush1.msra.mxu0 0.0
    %950 = vmatprep.subr.mxu0 0.0
    %951 = vmatpush1.msra.mxu0 0.0
    %952 = vmatprep.subr.mxu0 0.0
    %953 = vmatpush1.msra.mxu0 0.0
    %954 = vmatprep.subr.mxu0 0.0
    %955 = vmatpush1.msra.mxu0 0.0
    %956 = vmatprep.subr.mxu0 0.0
    %957 = vmatpush1.msra.mxu0 0.0
    %958 = vmatprep.subr.mxu0 0.0
    %959 = vmatpush1.msra.mxu0 0.0
    %960 = vmatprep.subr.mxu0 %v931
    %961 = vmatpush1.msra.mxu0 %v928
    %962 = vmatprep.subr.mxu0 %v908
    %963 = vmatpush1.msra.mxu0 %v907
    %964 = vmatprep.subr.mxu0 %v905
    %965 = vmatpush1.msra.mxu0 %v904
    %966 = vmatprep.subr.mxu0 %v902
    %967 = vmatpush1.msra.mxu0 %v901
    %968 = vmatprep.subr.mxu0 0.0
    %969 = vmatpush2.msra.mxu0 0.0
    %970 = vmatprep.subr.mxu0 0.0
    %971 = vmatpush2.msra.mxu0 0.0
    %972 = vmatprep.subr.mxu0 0.0
    %973 = vmatpush2.msra.mxu0 0.0
    %974 = vmatprep.subr.mxu0 0.0
    %975 = vmatpush2.msra.mxu0 0.0
    %976 = vmatprep.subr.mxu0 0.0
    %977 = vmatpush2.msra.mxu0 0.0
    %978 = vmatprep.subr.mxu0 0.0
    %979 = vmatpush2.msra.mxu0 0.0
    %980 = vmatprep.subr.mxu0 0.0
    %981 = vmatpush2.msra.mxu0 0.0
    %982 = vmatprep.subr.mxu0 0.0
    %983 = vmatpush2.msra.mxu0 0.0
    %984 = vmatprep.subr.mxu0 0.0
    %985 = vmatpush2.msra.mxu0 0.0
    %986 = vmatprep.subr.mxu0 0.0
    %987 = vmatpush2.msra.mxu0 0.0
    %988 = vmatprep.subr.mxu0 0.0
    %989 = vmatpush2.msra.mxu0 0.0
    %990 = vmatprep.subr.mxu0 0.0
    %991 = vmatpush2.msra.mxu0 0.0
    %992 = vmatprep.subr.mxu0 0.0
    %993 = vmatpush2.msra.mxu0 0.0
    %994 = vmatprep.subr.mxu0 0.0
    %995 = vmatpush2.msra.mxu0 0.0
    %996 = vmatprep.subr.mxu0 0.0
    %997 = vmatpush2.msra.mxu0 0.0
    %998 = vmatprep.subr.mxu0 0.0
    %999 = vmatpush2.msra.mxu0 0.0
    %1000 = vmatprep.mubr.f32.mxu0 0.0
    %1001 = vmatmul.mubr.f32.gmra.mxu0 %v915
    %v1002 = vpop.f32.mrf.mxu0
    %v1003 = vadd.f32 0.0, %v1002
    %v1004 = vpop.f32.mrf.mxu0
    %v1005 = vadd.f32 0.0, %v1004
    %1006 = vmatprep.mubr.f32.mxu0 0.0
    %1007 = vmatmul.mubr.f32.gmra.mxu0 %v918
    %v1008 = vpop.f32.mrf.mxu0
    %v1009 = vadd.f32 0.0, %v1008
    %v1010 = vpop.f32.mrf.mxu0
    %v1011 = vadd.f32 0.0, %v1010
    %1012 = vmatprep.mubr.f32.mxu0 0.0
    %1013 = vmatmul.mubr.f32.gmra.mxu0 %v921
    %v1014 = vpop.f32.mrf.mxu0
    %v1015 = vadd.f32 0.0, %v1014
    %v1016 = vpop.f32.mrf.mxu0
    %v1017 = vadd.f32 0.0, %v1016
    %1018 = vmatprep.mubr.f32.mxu0 0.0
    %1019 = vmatmul.mubr.f32.gmra.mxu0 %v924
    %v1020 = vpop.f32.mrf.mxu0
    %v1021 = vadd.f32 0.0, %v1020
    %v1022 = vpop.f32.mrf.mxu0
    %v1023 = vadd.f32 0.0, %v1022
    %1024 = vdwg.mxu0
    %1025 = vmatprep.subr.mxu0 0.0
    %1026 = vmatpush1.msra.mxu0 0.0
    %1027 = vmatprep.subr.mxu0 0.0
    %1028 = vmatpush1.msra.mxu0 0.0
    %1029 = vmatprep.subr.mxu0 0.0
    %1030 = vmatpush1.msra.mxu0 0.0
    %1031 = vmatprep.subr.mxu0 0.0
    %1032 = vmatpush1.msra.mxu0 0.0
    %1033 = vmatprep.subr.mxu0 0.0
    %1034 = vmatpush1.msra.mxu0 0.0
    %1035 = vmatprep.subr.mxu0 0.0
    %1036 = vmatpush1.msra.mxu0 0.0
    %1037 = vmatprep.subr.mxu0 0.0
    %1038 = vmatpush1.msra.mxu0 0.0
    %1039 = vmatprep.subr.mxu0 0.0
    %1040 = vmatpush1.msra.mxu0 0.0
    %1041 = vmatprep.subr.mxu0 0.0
    %1042 = vmatpush1.msra.mxu0 0.0
    %1043 = vmatprep.subr.mxu0 0.0
    %1044 = vmatpush1.msra.mxu0 0.0
    %1045 = vmatprep.subr.mxu0 0.0
    %1046 = vmatpush1.msra.mxu0 0.0
    %1047 = vmatprep.subr.mxu0 0.0
    %1048 = vmatpush1.msra.mxu0 0.0
    %1049 = vmatprep.subr.mxu0 0.0
    %1050 = vmatpush1.msra.mxu0 %v934
    %1051 = vmatprep.subr.mxu0 0.0
    %1052 = vmatpush1.msra.mxu0 %v909
    %1053 = vmatprep.subr.mxu0 0.0
    %1054 = vmatpush1.msra.mxu0 %v906
    %1055 = vmatprep.subr.mxu0 0.0
    %1056 = vmatpush1.msra.mxu0 %v903
    %1057 = vmatprep.subr.mxu0 0.0
    %1058 = vmatpush2.msra.mxu0 0.0
    %1059 = vmatprep.subr.mxu0 0.0
    %1060 = vmatpush2.msra.mxu0 0.0
    %1061 = vmatprep.subr.mxu0 0.0
    %1062 = vmatpush2.msra.mxu0 0.0
    %1063 = vmatprep.subr.mxu0 0.0
    %1064 = vmatpush2.msra.mxu0 0.0
    %1065 = vmatprep.subr.mxu0 0.0
    %1066 = vmatpush2.msra.mxu0 0.0
    %1067 = vmatprep.subr.mxu0 0.0
    %1068 = vmatpush2.msra.mxu0 0.0
    %1069 = vmatprep.subr.mxu0 0.0
    %1070 = vmatpush2.msra.mxu0 0.0
    %1071 = vmatprep.subr.mxu0 0.0
    %1072 = vmatpush2.msra.mxu0 0.0
    %1073 = vmatprep.subr.mxu0 0.0
    %1074 = vmatpush2.msra.mxu0 0.0
    %1075 = vmatprep.subr.mxu0 0.0
    %1076 = vmatpush2.msra.mxu0 0.0
    %1077 = vmatprep.subr.mxu0 0.0
    %1078 = vmatpush2.msra.mxu0 0.0
    %1079 = vmatprep.subr.mxu0 0.0
    %1080 = vmatpush2.msra.mxu0 0.0
    %1081 = vmatprep.subr.mxu0 0.0
    %1082 = vmatpush2.msra.mxu0 0.0
    %1083 = vmatprep.subr.mxu0 0.0
    %1084 = vmatpush2.msra.mxu0 0.0
    %1085 = vmatprep.subr.mxu0 0.0
    %1086 = vmatpush2.msra.mxu0 0.0
    %1087 = vmatprep.subr.mxu0 0.0
    %1088 = vmatpush2.msra.mxu0 0.0
    %1089 = vmatprep.mubr.f32.mxu0 0.0
    %1090 = vmatmul.mubr.f32.gmra.mxu0 %v915
    %v1091 = vpop.f32.mrf.mxu0
    %v1092 = vadd.f32 0.0, %v1091
    %v1093 = vpop.f32.mrf.mxu0
    %1094 = vmatprep.mubr.f32.mxu0 0.0
    %1095 = vmatmul.mubr.f32.gmra.mxu0 %v918
    %v1096 = vpop.f32.mrf.mxu0
    %v1097 = vadd.f32 0.0, %v1096
    %v1098 = vpop.f32.mrf.mxu0
    %1099 = vmatprep.mubr.f32.mxu0 0.0
    %1100 = vmatmul.mubr.f32.gmra.mxu0 %v921
    %v1101 = vpop.f32.mrf.mxu0
    %v1102 = vadd.f32 0.0, %v1101
    %v1103 = vpop.f32.mrf.mxu0
    %1104 = vmatprep.mubr.f32.mxu0 0.0
    %1105 = vmatmul.mubr.f32.gmra.mxu0 %v924
    %v1106 = vpop.f32.mrf.mxu0
    %v1107 = vadd.f32 0.0, %v1106
    %v1108 = vpop.f32.mrf.mxu0
    %1109 = vdwg.mxu0
    %v1110 = vld [vmem:[%s5] sm:$0x3]
    %v1111 = vld [vmem:[%s4] sm:$0xff]
    %v1112 = vld [vmem:[%s4 + $0x8] sm:$0xff]
    %v1113 = vld [vmem:[%s4 + $0x10] sm:$0xff]
    %v1114 = vld [vmem:[%s4 + $0x18] sm:$0xff]
    %v1115 = vld [vmem:[%s4 + $0x20] sm:$0xff]
    %v1116 = vld [vmem:[%s4 + $0x28] sm:$0xff]
    %v1117 = vld [vmem:[%s4 + $0x30] sm:$0xff]
    %v1118 = vld [vmem:[%s4 + $0x38] sm:$0xff]
    %v1119 = vld [vmem:[%s4 + $0x40] sm:$0xff]
    %v1120 = vld [vmem:[%s4 + $0x48] sm:$0xf]
    %v1121 = vld [vmem:[%s4 + $0x50] sm:$0xf]
    %v1122 = vld [vmem:[%s4 + $0x58] sm:$0xf]
    %v1123 = vmul.f32 %v1003, %v1111
    %v1124 = vmul.f32 %v1005, %v1112
    %v1125 = vmul.f32 %v1092, %v1113
    %v1126 = vmul.f32 %v1009, %v1114
    %v1127 = vmul.f32 %v1011, %v1115
    %v1128 = vmul.f32 %v1097, %v1116
    %v1129 = vmul.f32 %v1015, %v1117
    %v1130 = vmul.f32 %v1017, %v1118
    %v1131 = vmul.f32 %v1102, %v1119
    %v1132 = vmul.f32 %v1021, %v1120
    %v1133 = vmul.f32 %v1023, %v1121
    %v1134 = vmul.f32 %v1107, %v1122
    %v1136 = vsel %vm576, %v1110, 0
    %v1139 = vsel %vm137, %v1132, 0
    %v1142 = vsel %vm137, %v1133, 0
    %v1145 = vsel %vm137, %v1134, 0
    %1147 = vmatprep.subr.mxu0 0.0
    %1148 = vmatpush1.msra.mxu0 0.0
    %1149 = vmatprep.subr.mxu0 0.0
    %1150 = vmatpush1.msra.mxu0 0.0
    %1151 = vmatprep.subr.mxu0 0.0
    %1152 = vmatpush1.msra.mxu0 0.0
    %1153 = vmatprep.subr.mxu0 0.0
    %1154 = vmatpush1.msra.mxu0 0.0
    %1155 = vmatprep.subr.mxu0 0.0
    %1156 = vmatpush1.msra.mxu0 0.0
    %1157 = vmatprep.subr.mxu0 0.0
    %1158 = vmatpush1.msra.mxu0 0.0
    %1159 = vmatprep.subr.mxu0 0.0
    %1160 = vmatpush1.msra.mxu0 0.0
    %1161 = vmatprep.subr.mxu0 0.0
    %1162 = vmatpush1.msra.mxu0 0.0
    %1163 = vmatprep.subr.mxu0 0.0
    %1164 = vmatpush1.msra.mxu0 0.0
    %1165 = vmatprep.subr.mxu0 0.0
    %1166 = vmatpush1.msra.mxu0 0.0
    %1167 = vmatprep.subr.mxu0 0.0
    %1168 = vmatpush1.msra.mxu0 0.0
    %1169 = vmatprep.subr.mxu0 0.0
    %1170 = vmatpush1.msra.mxu0 0.0
    %1171 = vmatprep.subr.mxu0 %v1142
    %1172 = vmatpush1.msra.mxu0 %v1139
    %1173 = vmatprep.subr.mxu0 %v1130
    %1174 = vmatpush1.msra.mxu0 %v1129
    %1175 = vmatprep.subr.mxu0 %v1127
    %1176 = vmatpush1.msra.mxu0 %v1126
    %1177 = vmatprep.subr.mxu0 %v1124
    %1178 = vmatpush1.msra.mxu0 %v1123
    %1179 = vmatprep.subr.mxu0 0.0
    %1180 = vmatpush2.msra.mxu0 0.0
    %1181 = vmatprep.subr.mxu0 0.0
    %1182 = vmatpush2.msra.mxu0 0.0
    %1183 = vmatprep.subr.mxu0 0.0
    %1184 = vmatpush2.msra.mxu0 0.0
    %1185 = vmatprep.subr.mxu0 0.0
    %1186 = vmatpush2.msra.mxu0 0.0
    %1187 = vmatprep.subr.mxu0 0.0
    %1188 = vmatpush2.msra.mxu0 0.0
    %1189 = vmatprep.subr.mxu0 0.0
    %1190 = vmatpush2.msra.mxu0 0.0
    %1191 = vmatprep.subr.mxu0 0.0
    %1192 = vmatpush2.msra.mxu0 0.0
    %1193 = vmatprep.subr.mxu0 0.0
    %1194 = vmatpush2.msra.mxu0 0.0
    %1195 = vmatprep.subr.mxu0 0.0
    %1196 = vmatpush2.msra.mxu0 0.0
    %1197 = vmatprep.subr.mxu0 0.0
    %1198 = vmatpush2.msra.mxu0 0.0
    %1199 = vmatprep.subr.mxu0 0.0
    %1200 = vmatpush2.msra.mxu0 0.0
    %1201 = vmatprep.subr.mxu0 0.0
    %1202 = vmatpush2.msra.mxu0 0.0
    %1203 = vmatprep.subr.mxu0 0.0
    %1204 = vmatpush2.msra.mxu0 0.0
    %1205 = vmatprep.subr.mxu0 0.0
    %1206 = vmatpush2.msra.mxu0 0.0
    %1207 = vmatprep.subr.mxu0 0.0
    %1208 = vmatpush2.msra.mxu0 0.0
    %1209 = vmatprep.subr.mxu0 0.0
    %1210 = vmatpush2.msra.mxu0 0.0
    %1211 = vmatprep.mubr.f32.mxu0 0.0
    %1212 = vmatmul.mubr.f32.gmra.mxu0 %v1136
    %v1213 = vpop.f32.mrf.mxu0
    %v1214 = vadd.f32 0.0, %v1213
    %v1215 = vpop.f32.mrf.mxu0
    %v1216 = vadd.f32 0.0, %v1215
    %1217 = vdwg.mxu0
    %1218 = vmatprep.subr.mxu0 0.0
    %1219 = vmatpush1.msra.mxu0 0.0
    %1220 = vmatprep.subr.mxu0 0.0
    %1221 = vmatpush1.msra.mxu0 0.0
    %1222 = vmatprep.subr.mxu0 0.0
    %1223 = vmatpush1.msra.mxu0 0.0
    %1224 = vmatprep.subr.mxu0 0.0
    %1225 = vmatpush1.msra.mxu0 0.0
    %1226 = vmatprep.subr.mxu0 0.0
    %1227 = vmatpush1.msra.mxu0 0.0
    %1228 = vmatprep.subr.mxu0 0.0
    %1229 = vmatpush1.msra.mxu0 0.0
    %1230 = vmatprep.subr.mxu0 0.0
    %1231 = vmatpush1.msra.mxu0 0.0
    %1232 = vmatprep.subr.mxu0 0.0
    %1233 = vmatpush1.msra.mxu0 0.0
    %1234 = vmatprep.subr.mxu0 0.0
    %1235 = vmatpush1.msra.mxu0 0.0
    %1236 = vmatprep.subr.mxu0 0.0
    %1237 = vmatpush1.msra.mxu0 0.0
    %1238 = vmatprep.subr.mxu0 0.0
    %1239 = vmatpush1.msra.mxu0 0.0
    %1240 = vmatprep.subr.mxu0 0.0
    %1241 = vmatpush1.msra.mxu0 0.0
    %1242 = vmatprep.subr.mxu0 0.0
    %1243 = vmatpush1.msra.mxu0 %v1145
    %1244 = vmatprep.subr.mxu0 0.0
    %1245 = vmatpush1.msra.mxu0 %v1131
    %1246 = vmatprep.subr.mxu0 0.0
    %1247 = vmatpush1.msra.mxu0 %v1128
    %1248 = vmatprep.subr.mxu0 0.0
    %1249 = vmatpush1.msra.mxu0 %v1125
    %1250 = vmatprep.subr.mxu0 0.0
    %1251 = vmatpush2.msra.mxu0 0.0
    %1252 = vmatprep.subr.mxu0 0.0
    %1253 = vmatpush2.msra.mxu0 0.0
    %1254 = vmatprep.subr.mxu0 0.0
    %1255 = vmatpush2.msra.mxu0 0.0
    %1256 = vmatprep.subr.mxu0 0.0
    %1257 = vmatpush2.msra.mxu0 0.0
    %1258 = vmatprep.subr.mxu0 0.0
    %1259 = vmatpush2.msra.mxu0 0.0
    %1260 = vmatprep.subr.mxu0 0.0
    %1261 = vmatpush2.msra.mxu0 0.0
    %1262 = vmatprep.subr.mxu0 0.0
    %1263 = vmatpush2.msra.mxu0 0.0
    %1264 = vmatprep.subr.mxu0 0.0
    %1265 = vmatpush2.msra.mxu0 0.0
    %1266 = vmatprep.subr.mxu0 0.0
    %1267 = vmatpush2.msra.mxu0 0.0
    %1268 = vmatprep.subr.mxu0 0.0
    %1269 = vmatpush2.msra.mxu0 0.0
    %1270 = vmatprep.subr.mxu0 0.0
    %1271 = vmatpush2.msra.mxu0 0.0
    %1272 = vmatprep.subr.mxu0 0.0
    %1273 = vmatpush2.msra.mxu0 0.0
    %1274 = vmatprep.subr.mxu0 0.0
    %1275 = vmatpush2.msra.mxu0 0.0
    %1276 = vmatprep.subr.mxu0 0.0
    %1277 = vmatpush2.msra.mxu0 0.0
    %1278 = vmatprep.subr.mxu0 0.0
    %1279 = vmatpush2.msra.mxu0 0.0
    %1280 = vmatprep.subr.mxu0 0.0
    %1281 = vmatpush2.msra.mxu0 0.0
    %1282 = vmatprep.mubr.f32.mxu0 0.0
    %1283 = vmatmul.mubr.f32.gmra.mxu0 %v1136
    %v1284 = vpop.f32.mrf.mxu0
    %v1285 = vadd.f32 0.0, %v1284
    %v1286 = vpop.f32.mrf.mxu0
    %1287 = vdwg.mxu0
    %v1288 = vld [vmem:[%s10] sm:$0xff]
    %v1289 = vld [vmem:[%s10 + $0x8] sm:$0xff]
    %v1290 = vld [vmem:[%s10 + $0x10] sm:$0xff]
    %v1291 = vld [vmem:[%s10 + $0x18] sm:$0xff]
    %v1292 = vld [vmem:[%s10 + $0x20] sm:$0xff]
    %v1293 = vld [vmem:[%s10 + $0x28] sm:$0xff]
    %v1294 = vld [vmem:[%s10 + $0x30] sm:$0xff]
    %v1295 = vld [vmem:[%s10 + $0x38] sm:$0xff]
    %v1296 = vld [vmem:[%s10 + $0x40] sm:$0xff]
    %v1297 = vld [vmem:[%s10 + $0x48] sm:$0xff]
    %v1298 = vld [vmem:[%s10 + $0x50] sm:$0xff]
    %v1299 = vld [vmem:[%s10 + $0x58] sm:$0xff]
    %v1300 = vld [vmem:[%s10 + $0x60] sm:$0xff]
    %v1301 = vld [vmem:[%s10 + $0x68] sm:$0xff]
    %v1302 = vld [vmem:[%s10 + $0x70] sm:$0xff]
    %v1303 = vld [vmem:[%s10 + $0x78] sm:$0xff]
    %v1304 = vld [vmem:[%s10 + $0x80] sm:$0xff]
    %v1305 = vld [vmem:[%s10 + $0x88] sm:$0xff]
    %v1306 = vld [vmem:[%s10 + $0x90] sm:$0xff]
    %v1307 = vld [vmem:[%s10 + $0x98] sm:$0xff]
    %v1308 = vld [vmem:[%s10 + $0xa0] sm:$0xff]
    %v1309 = vld [vmem:[%s10 + $0xa8] sm:$0xff]
    %v1310 = vld [vmem:[%s10 + $0xb0] sm:$0xff]
    %v1311 = vld [vmem:[%s10 + $0xb8] sm:$0xff]
    %v1312 = vld [vmem:[%s10 + $0xc0] sm:$0xff]
    %v1313 = vld [vmem:[%s10 + $0xc8] sm:$0xff]
    %v1314 = vld [vmem:[%s10 + $0xd0] sm:$0xff]
    %v1315 = vld [vmem:[%s10 + $0xd8] sm:$0xff]
    %v1316 = vld [vmem:[%s10 + $0xe0] sm:$0xff]
    %v1317 = vld [vmem:[%s10 + $0xe8] sm:$0xff]
    %v1318 = vld [vmem:[%s10 + $0xf0] sm:$0xff]
    %v1319 = vld [vmem:[%s10 + $0xf8] sm:$0xff]
    %v1320 = vld [vmem:[%s10 + $0x100] sm:$0xff]
    %v1321 = vld [vmem:[%s10 + $0x108] sm:$0xff]
    %v1322 = vld [vmem:[%s10 + $0x110] sm:$0xff]
    %v1323 = vld [vmem:[%s10 + $0x118] sm:$0xff]
    %v1324 = vld [vmem:[%s10 + $0x120] sm:$0xff]
    %v1325 = vld [vmem:[%s10 + $0x128] sm:$0xff]
    %v1326 = vld [vmem:[%s10 + $0x130] sm:$0xff]
    %v1327 = vld [vmem:[%s10 + $0x138] sm:$0xff]
    %v1328 = vld [vmem:[%s10 + $0x140] sm:$0xff]
    %v1329 = vld [vmem:[%s10 + $0x148] sm:$0xff]
    %v1330 = vld [vmem:[%s10 + $0x150] sm:$0xff]
    %v1331 = vld [vmem:[%s10 + $0x158] sm:$0x3f]
    %vm1332 = vcmask 769024
    %v1334 = vsel %vm1332, %v1285, 0
    %vm1336 = vcmask 1045504
    %v1338 = vsel %vm1336, %v1331, 0
    %1340 = vmatprep.subr.mxu0 0.0
    %1341 = vmatpush1.msra.mxu0 %v1303
    %1342 = vmatprep.subr.mxu0 0.0
    %1343 = vmatpush1.msra.mxu0 %v1302
    %1344 = vmatprep.subr.mxu0 0.0
    %1345 = vmatpush1.msra.mxu0 %v1301
    %1346 = vmatprep.subr.mxu0 0.0
    %1347 = vmatpush1.msra.mxu0 %v1300
    %1348 = vmatprep.subr.mxu0 0.0
    %1349 = vmatpush1.msra.mxu0 %v1299
    %1350 = vmatprep.subr.mxu0 0.0
    %1351 = vmatpush1.msra.mxu0 %v1298
    %1352 = vmatprep.subr.mxu0 0.0
    %1353 = vmatpush1.msra.mxu0 %v1297
    %1354 = vmatprep.subr.mxu0 0.0
    %1355 = vmatpush1.msra.mxu0 %v1296
    %1356 = vmatprep.subr.mxu0 0.0
    %1357 = vmatpush1.msra.mxu0 %v1295
    %1358 = vmatprep.subr.mxu0 0.0
    %1359 = vmatpush1.msra.mxu0 %v1294
    %1360 = vmatprep.subr.mxu0 0.0
    %1361 = vmatpush1.msra.mxu0 %v1293
    %1362 = vmatprep.subr.mxu0 0.0
    %1363 = vmatpush1.msra.mxu0 %v1292
    %1364 = vmatprep.subr.mxu0 0.0
    %1365 = vmatpush1.msra.mxu0 %v1291
    %1366 = vmatprep.subr.mxu0 0.0
    %1367 = vmatpush1.msra.mxu0 %v1290
    %1368 = vmatprep.subr.mxu0 0.0
    %1369 = vmatpush1.msra.mxu0 %v1289
    %1370 = vmatprep.subr.mxu0 0.0
    %1371 = vmatpush1.msra.mxu0 %v1288
    %1372 = vmatprep.subr.mxu0 0.0
    %1373 = vmatpush2.msra.mxu0 %v1319
    %1374 = vmatprep.subr.mxu0 0.0
    %1375 = vmatpush2.msra.mxu0 %v1318
    %1376 = vmatprep.subr.mxu0 0.0
    %1377 = vmatpush2.msra.mxu0 %v1317
    %1378 = vmatprep.subr.mxu0 0.0
    %1379 = vmatpush2.msra.mxu0 %v1316
    %1380 = vmatprep.subr.mxu0 0.0
    %1381 = vmatpush2.msra.mxu0 %v1315
    %1382 = vmatprep.subr.mxu0 0.0
    %1383 = vmatpush2.msra.mxu0 %v1314
    %1384 = vmatprep.subr.mxu0 0.0
    %1385 = vmatpush2.msra.mxu0 %v1313
    %1386 = vmatprep.subr.mxu0 0.0
    %1387 = vmatpush2.msra.mxu0 %v1312
    %1388 = vmatprep.subr.mxu0 0.0
    %1389 = vmatpush2.msra.mxu0 %v1311
    %1390 = vmatprep.subr.mxu0 0.0
    %1391 = vmatpush2.msra.mxu0 %v1310
    %1392 = vmatprep.subr.mxu0 0.0
    %1393 = vmatpush2.msra.mxu0 %v1309
    %1394 = vmatprep.subr.mxu0 0.0
    %1395 = vmatpush2.msra.mxu0 %v1308
    %1396 = vmatprep.subr.mxu0 0.0
    %1397 = vmatpush2.msra.mxu0 %v1307
    %1398 = vmatprep.subr.mxu0 0.0
    %1399 = vmatpush2.msra.mxu0 %v1306
    %1400 = vmatprep.subr.mxu0 0.0
    %1401 = vmatpush2.msra.mxu0 %v1305
    %1402 = vmatprep.subr.mxu0 0.0
    %1403 = vmatpush2.msra.mxu0 %v1304
    %1404 = vmatprep.mubr.f32.mxu0 %v1216
    %1405 = vmatmul.mubr.f32.gmra.mxu0 %v1214
    %v1406 = vpop.f32.mrf.mxu0
    %v1407 = vadd.f32 0.0, %v1406
    %v1408 = vpop.f32.mrf.mxu0
    %1409 = vdwg.mxu0
    %1410 = vmatprep.subr.mxu0 0.0
    %1411 = vmatpush1.msra.mxu0 0.0
    %1412 = vmatprep.subr.mxu0 0.0
    %1413 = vmatpush1.msra.mxu0 0.0
    %1414 = vmatprep.subr.mxu0 0.0
    %1415 = vmatpush1.msra.mxu0 0.0
    %1416 = vmatprep.subr.mxu0 0.0
    %1417 = vmatpush1.msra.mxu0 0.0
    %1418 = vmatprep.subr.mxu0 0.0
    %1419 = vmatpush1.msra.mxu0 %v1338
    %1420 = vmatprep.subr.mxu0 0.0
    %1421 = vmatpush1.msra.mxu0 %v1330
    %1422 = vmatprep.subr.mxu0 0.0
    %1423 = vmatpush1.msra.mxu0 %v1329
    %1424 = vmatprep.subr.mxu0 0.0
    %1425 = vmatpush1.msra.mxu0 %v1328
    %1426 = vmatprep.subr.mxu0 0.0
    %1427 = vmatpush1.msra.mxu0 %v1327
    %1428 = vmatprep.subr.mxu0 0.0
    %1429 = vmatpush1.msra.mxu0 %v1326
    %1430 = vmatprep.subr.mxu0 0.0
    %1431 = vmatpush1.msra.mxu0 %v1325
    %1432 = vmatprep.subr.mxu0 0.0
    %1433 = vmatpush1.msra.mxu0 %v1324
    %1434 = vmatprep.subr.mxu0 0.0
    %1435 = vmatpush1.msra.mxu0 %v1323
    %1436 = vmatprep.subr.mxu0 0.0
    %1437 = vmatpush1.msra.mxu0 %v1322
    %1438 = vmatprep.subr.mxu0 0.0
    %1439 = vmatpush1.msra.mxu0 %v1321
    %1440 = vmatprep.subr.mxu0 0.0
    %1441 = vmatpush1.msra.mxu0 %v1320
    %1442 = vmatprep.subr.mxu0 0.0
    %1443 = vmatpush2.msra.mxu0 0.0
    %1444 = vmatprep.subr.mxu0 0.0
    %1445 = vmatpush2.msra.mxu0 0.0
    %1446 = vmatprep.subr.mxu0 0.0
    %1447 = vmatpush2.msra.mxu0 0.0
    %1448 = vmatprep.subr.mxu0 0.0
    %1449 = vmatpush2.msra.mxu0 0.0
    %1450 = vmatprep.subr.mxu0 0.0
    %1451 = vmatpush2.msra.mxu0 0.0
    %1452 = vmatprep.subr.mxu0 0.0
    %1453 = vmatpush2.msra.mxu0 0.0
    %1454 = vmatprep.subr.mxu0 0.0
    %1455 = vmatpush2.msra.mxu0 0.0
    %1456 = vmatprep.subr.mxu0 0.0
    %1457 = vmatpush2.msra.mxu0 0.0
    %1458 = vmatprep.subr.mxu0 0.0
    %1459 = vmatpush2.msra.mxu0 0.0
    %1460 = vmatprep.subr.mxu0 0.0
    %1461 = vmatpush2.msra.mxu0 0.0
    %1462 = vmatprep.subr.mxu0 0.0
    %1463 = vmatpush2.msra.mxu0 0.0
    %1464 = vmatprep.subr.mxu0 0.0
    %1465 = vmatpush2.msra.mxu0 0.0
    %1466 = vmatprep.subr.mxu0 0.0
    %1467 = vmatpush2.msra.mxu0 0.0
    %1468 = vmatprep.subr.mxu0 0.0
    %1469 = vmatpush2.msra.mxu0 0.0
    %1470 = vmatprep.subr.mxu0 0.0
    %1471 = vmatpush2.msra.mxu0 0.0
    %1472 = vmatprep.subr.mxu0 0.0
    %1473 = vmatpush2.msra.mxu0 0.0
    %1474 = vmatprep.mubr.f32.mxu0 0.0
    %1475 = vmatmul.mubr.f32.gmra.mxu0 %v1334
    %v1476 = vpop.f32.mrf.mxu0
    %v1477 = vadd.f32 %v1407, %v1476
    %v1478 = vpop.f32.mrf.mxu0
    %1479 = vdwg.mxu0
    %s1480 = sld [smem:[#allocation8]]
    %v1481 = vstv %s1480
    %v1482 = vadd.f32 %v1477, %v1481
    %s1483 = sld [smem:[#allocation8 + $0x1]]
    %v1484 = vstv %s1483
    %v1485 = vadd.f32 %v1477, %v1484
    %1487 = vrot.lane.b32.xlu0 %v1485, 127
    %v1488 = vpop.permute.xlu0 %1487
    %v1490 = vmax.f32 %v1482, %v1488
    %v1491 = vsub.f32 %v1482, %v1490
    %v1492 = vmul.f32 %v1491, 1.442695
    %v1493 = vpow.pop %v1492
    %1495 = vrot.lane.b32.xlu0 %v1490, 1
    %v1496 = vpop.permute.xlu0 %1495
    %v1498 = vsub.f32 %v1485, %v1496
    %v1499 = vmul.f32 %v1498, 1.442695
    %v1500 = vpow.pop %v1499
    %1502 = vrot.lane.b32.xlu0 %v1500, 127
    %v1503 = vpop.permute.xlu0 %1502
    %v1505 = vadd.f32 %v1493, %v1503
    %v1506 = vrcp.pop %v1505
    %v1507 = vmul.f32 1.0, %v1506
    %v1508 = vmul.f32 %v1493, %v1507
    %vm1509 = vcmask 1024
    %1510 = vst.msk [vmem:[#allocation10] sm:$0x3] %vm1509, %v1508
    %1512 = vrot.lane.b32.xlu0 %v1507, 1
    %v1513 = vpop.permute.xlu0 %1512
    %v1515 = vmul.f32 %v1500, %v1513
    %vm1516 = vcmask 9224
    %1517 = vst.msk [vmem:[#allocation10] sm:$0x3] %vm1516, %v1515
    // Predicated region
    $region58: #{cnn3_forward.1} parent=1 // pred_check
      _
    $region59: #{cnn3_forward.1} parent=1 // pred_check_branch
      %1519 = sbr.rel (0) target = $region61
    $region60: #{cnn3_forward.1} parent=1 // pred_region
      %s1521 = ssub.s32 32, 32
      %1522 = vsyncadd [#allocation6], %s1521
      %s1524 = sshll.u32 [#allocation10], 4
      %s1525 = int_to_ptr.vmem [resolvable:$true] %s1524
      %1527 = dma.vmem_to_hbm [thread:$0]  %s1525, 32, %s12, [#allocation6]
    $region61: #{cnn3_forward.1} parent=1 // pred_fallthru
      _
    // Predicated region
    $region62: #{cnn3_forward.1} parent=1 // pred_check
      _
    $region63: #{cnn3_forward.1} parent=1 // pred_check_branch
      %1529 = sbr.rel (0) target = $region65
    $region64: #{cnn3_forward.1} parent=1 // pred_region
      %1530 = dma.done [#allocation6], 32
    $region65: #{cnn3_forward.1} parent=1 // pred_fallthru
      _
    %1531 = vsyncpa [#allocation6], 1
    %1532 = vsyncpa [#allocation7], 1
    %1533 = vsyncpa [#allocation9], 1

</llo_original>
